<compile_context>
chip_gen: v7x
topology: tpu7x:2x2x1
jax: 0.10.0
libtpu: 0.0.40
codegen_flags: <defaults>
</compile_context>

<pallas_src>
import numpy as np
import jax
import jax.numpy as jnp
from jax import lax
from jax import image as jimage
from jax.experimental import pallas as pl
from jax.experimental.pallas import tpu as pltpu


# Taps of the 3x3 stride-2 transposed conv (padding=1, output_padding=1) that
# land on each output parity p = 2*py + px.  Each entry is ((ky, kx), variant)
# where variant indexes the shifted copies of the input plane:
#   0: y[m, n]   1: y[m, n+1]   2: y[m+1, n]   3: y[m+1, n+1]   (zero outside)
_PARITY_TAPS = (
    (((1, 1), 0),),                                        # (even row, even col)
    (((1, 2), 0), ((1, 0), 1)),                            # (even row, odd  col)
    (((2, 1), 0), ((0, 1), 2)),                            # (odd  row, even col)
    (((2, 2), 0), ((2, 0), 1), ((0, 2), 2), ((0, 0), 3)),  # (odd  row, odd  col)
)


def _make_kernel(C, H, W):
    HW = H * W
    Cout = C // 2

    def kernel(x_ref, w1_ref, mt_ref, w3_ref, w4_ref, a_ref, o_ref,
               yp_ref, zp_ref, rp_ref):
        a1 = a_ref[0]
        a2 = a_ref[1]
        x = x_ref[0]                                           # (C, H*W) f32

        # ---------------- top branch: 1x1 conv (MXU) + PReLU -----------------
        y = jnp.dot(w1_ref[...], x, preferred_element_type=jnp.float32)
        y = jnp.where(y >= 0, y, a1 * y)

        # zero-padded copy of y so the +1 shifts in H / W are plain static
        # window reads (boundary taps read zeros).
        yp_ref[:, :HW] = y
        yp_ref[:, HW:] = jnp.zeros((C, W + 1), jnp.float32)

        not_last_col = (lax.broadcasted_iota(jnp.int32, (C, HW), 1) % W) != (W - 1)
        y_sw = jnp.where(not_last_col, yp_ref[:, 1:HW + 1], 0.0)           # y[m, n+1]
        y_sh = yp_ref[:, W:HW + W]                                          # y[m+1, n]
        y_shw = jnp.where(not_last_col, yp_ref[:, W + 1:HW + W + 1], 0.0)   # y[m+1, n+1]
        variants = (y, y_sw, y_sh, y_shw)

        # -------------- bot branch: 1x1 conv (MXU) + bilinear x2 -------------
        # The 1x1 conv commutes with the (linear, channelwise) bilinear
        # upsample, so mix channels first at the low resolution.
        z = jnp.dot(w4_ref[...], x, preferred_element_type=jnp.float32)     # (C/2, H*W)

        # row-padded copy (first / last row replicated) for the edge-clamped
        # row neighbours of the align_corners=False bilinear kernel.
        zp_ref[:, W:HW + W] = z
        zp_ref[:, :W] = z[:, :W]
        zp_ref[:, HW + W:] = z[:, HW - W:]
        z_up = zp_ref[:, 0:HW]                        # z[m-1, n]  (clamped)
        z_dn = zp_ref[:, 2 * W:HW + 2 * W]            # z[m+1, n]  (clamped)

        r_ev = 0.75 * z + 0.25 * z_up                 # even output rows
        r_od = 0.75 * z + 0.25 * z_dn                 # odd  output rows

        # column blend of each row-blended plane (bilinear is separable).
        rp_ref[:, :, 0:1] = jnp.zeros((2, Cout, 1), jnp.float32)
        rp_ref[:, :, HW + 1:] = jnp.zeros((2, Cout, 1), jnp.float32)
        rp_ref[0, :, 1:HW + 1] = r_ev
        rp_ref[1, :, 1:HW + 1] = r_od
        col = lax.broadcasted_iota(jnp.int32, (Cout, HW), 1) % W
        first_col = col == 0
        last_col = col == (W - 1)
        bots = []
        for pr, r in enumerate((r_ev, r_od)):
            r_lt = jnp.where(first_col, r, rp_ref[pr, :, 0:HW])      # r[m, n-1] (clamped)
            r_rt = jnp.where(last_col, r, rp_ref[pr, :, 2:HW + 2])   # r[m, n+1] (clamped)
            bots.append(0.75 * r + 0.25 * r_lt)       # even output cols
            bots.append(0.75 * r + 0.25 * r_rt)       # odd  output cols

        # ------ transposed-conv taps (MXU) + PReLU + final 1x1 + residual ----
        w3 = w3_ref[...]
        for p in range(4):                            # 4 fixed output parities
            taps = _PARITY_TAPS[p]
            (ky, kx), v = taps[0]
            t = jnp.dot(mt_ref[ky * 3 + kx], variants[v],
                        preferred_element_type=jnp.float32)
            for (ky, kx), v in taps[1:]:
                t = t + jnp.dot(mt_ref[ky * 3 + kx], variants[v],
                                preferred_element_type=jnp.float32)
            t = jnp.where(t >= 0, t, a2 * t)                          # PReLU
            top = jnp.dot(w3, t, preferred_element_type=jnp.float32)  # (C/2, H*W)
            o_ref[0, p] = (top + bots[p]).astype(o_ref.dtype)         # lane-dense store

    return kernel


def _tconv_tap_matrices(wt):
    """(9, C, C) channel-mix matrices: taps[ky*3+kx][o, i] = wt[i, o, ky, kx]."""
    wt = np.asarray(wt, np.float32)            # PyTorch ConvTranspose2d (in, out, kh, kw)
    C = wt.shape[0]
    return jnp.asarray(np.transpose(wt, (2, 3, 1, 0)).reshape(9, C, C))


def residual_upsample(x, w1, a1, wt, a2, w3, w4):
    """x: (N, C, H, W).  Weights in PyTorch layouts:
       w1 (C, C, 1, 1), wt (C, C, 3, 3) [ConvTranspose2d (in,out,kh,kw)],
       w3 (C//2, C, 1, 1), w4 (C//2, C, 1, 1).  a1/a2: PReLU scalars.
       Returns (N, C//2, 2H, 2W)."""
    N, C, H, W = x.shape
    assert C % 2 == 0
    Cout = C // 2
    HW = H * W

    x_flat = x.reshape(N, C, HW).astype(jnp.float32)    # lane-dense spatial slab
    w1m = jnp.asarray(w1, jnp.float32).reshape(C, C)
    mt = _tconv_tap_matrices(wt)
    w3m = jnp.asarray(w3, jnp.float32).reshape(Cout, C)
    w4m = jnp.asarray(w4, jnp.float32).reshape(Cout, C)
    alphas = jnp.asarray([a1, a2], jnp.float32)

    smem = pl.BlockSpec(memory_space=pltpu.MemorySpace.SMEM)
    grid_spec = pltpu.PrefetchScalarGridSpec(
        num_scalar_prefetch=0,
        grid=(N,),
        in_specs=[
            pl.BlockSpec((1, C, HW), lambda n: (n, 0, 0)),   # x           (VMEM)
            pl.BlockSpec((C, C), lambda n: (0, 0)),          # conv1 1x1   (VMEM)
            pl.BlockSpec((9, C, C), lambda n: (0, 0, 0)),    # tconv taps  (VMEM)
            pl.BlockSpec((Cout, C), lambda n: (0, 0)),       # top 1x1     (VMEM)
            pl.BlockSpec((Cout, C), lambda n: (0, 0)),       # bot 1x1     (VMEM)
            smem,                                            # PReLU alphas (2,)
        ],
        out_specs=pl.BlockSpec((1, 4, Cout, HW), lambda n: (n, 0, 0, 0)),
        scratch_shapes=[
            pltpu.VMEM((C, HW + W + 1), jnp.float32),        # zero-padded y
            pltpu.VMEM((Cout, HW + 2 * W), jnp.float32),     # row-clamped z
            pltpu.VMEM((2, Cout, HW + 2), jnp.float32),      # col-padded row blends
        ],
    )

    out_par = pl.pallas_call(
        _make_kernel(C, H, W),
        out_shape=jax.ShapeDtypeStruct((N, 4, Cout, HW), x.dtype),
        grid_spec=grid_spec,
        compiler_params=pltpu.CompilerParams(dimension_semantics=("parallel",)),
    )(x_flat, w1m, mt, w3m, w4m, alphas)

    # pixel-shuffle the 4 parity planes back to NCHW:
    #   out_par[n, 2*py+px, c, m*W + w] == out[n, c, 2*m + py, 2*w + px]
    out = out_par.reshape(N, 2, 2, Cout, H, W)
    out = out.transpose(0, 3, 4, 1, 5, 2).reshape(N, Cout, 2 * H, 2 * W)
    return out


# ----------------------------- pure-JAX reference -----------------------------
def _prelu(v, a):
    return jnp.where(v >= 0, v, a * v)


def _reference(x, w1, a1, wt, a2, w3, w4):
    dn = ('NCHW', 'OIHW', 'NCHW')
    N, C, H, W = x.shape
    conv1x1 = lambda v, w: lax.conv_general_dilated(
        v, w, (1, 1), 'VALID', dimension_numbers=dn,
        precision=lax.Precision.HIGHEST)

    # top branch
    y = _prelu(conv1x1(x, w1), a1)
    # ConvTranspose2d(3, stride=2, padding=1, output_padding=1) as a forward
    # conv: lhs_dilation=2, padding (k-1-p, k-1-p+op) = (1, 2), kernel flipped
    # spatially and transposed in (in, out).
    wt_conv = jnp.flip(wt, (2, 3)).transpose(1, 0, 2, 3)
    y = lax.conv_general_dilated(y, wt_conv, (1, 1), ((1, 2), (1, 2)),
                                 lhs_dilation=(2, 2), dimension_numbers=dn,
                                 precision=lax.Precision.HIGHEST)
    y = _prelu(y, a2)
    top = conv1x1(y, w3)

    # bot branch: bilinear x2 with align_corners=False semantics
    bot = jimage.resize(x, (N, C, 2 * H, 2 * W), method='bilinear',
                        precision=lax.Precision.HIGHEST)
    bot = conv1x1(bot, w4)
    return top + bot


if __name__ == "__main__":
    N, C, H, W = 2, 8, 16, 16
    key = jax.random.PRNGKey(0)
    k = jax.random.split(key, 5)
    x = jax.random.normal(k[0], (N, C, H, W), jnp.float32)
    # deterministic synthetic parameters in PyTorch layouts (bias=False)
    w1 = jax.random.normal(k[1], (C, C, 1, 1), jnp.float32) * 0.3       # Conv2d
    wt = jax.random.normal(k[2], (C, C, 3, 3), jnp.float32) * 0.2       # ConvTranspose2d (in,out,kh,kw)
    w3 = jax.random.normal(k[3], (C // 2, C, 1, 1), jnp.float32) * 0.3  # Conv2d
    w4 = jax.random.normal(k[4], (C // 2, C, 1, 1), jnp.float32) * 0.3  # Conv2d
    a1 = 0.25    # nn.PReLU() scalars
    a2 = 0.1

    out = residual_upsample(x, w1, a1, wt, a2, w3, w4)
    out = jax.block_until_ready(out)
    assert out.shape == (N, C // 2, 2 * H, 2 * W)

    ref = _reference(x, w1, a1, wt, a2, w3, w4)
    np.testing.assert_allclose(np.asarray(out), np.asarray(ref),
                               rtol=1e-4, atol=1e-4)
    print("KERNEL_OK")
</pallas_src>

<mosaic_0001>
module attributes {stable_mosaic.version = 11 : i64} {
  func.func @kernel(%arg0: i32, %arg1: memref<1x8x256xf32, #tpu.memory_space<vmem>>, %arg2: memref<8x8xf32, #tpu.memory_space<vmem>>, %arg3: memref<9x8x8xf32, #tpu.memory_space<vmem>>, %arg4: memref<4x8xf32, #tpu.memory_space<vmem>>, %arg5: memref<4x8xf32, #tpu.memory_space<vmem>>, %arg6: memref<2xf32, #tpu.memory_space<smem>>, %arg7: memref<1x4x4x256xf32, #tpu.memory_space<vmem>>, %arg8: memref<8x273xf32, #tpu.memory_space<vmem>>, %arg9: memref<4x288xf32, #tpu.memory_space<vmem>>, %arg10: memref<2x4x258xf32, #tpu.memory_space<vmem>>) attributes {dimension_semantics = [#tpu.dimension_semantics<parallel>], iteration_bounds = array<i64: 2>, scalar_prefetch = 0 : i64, scratch_operands = 3 : i64, tpu.core_type = #tpu.core_type<tc>, window_params = [{transform_indices = @transform_0, window_bounds = array<i64: 1, 8, 256>}, {pipeline_mode = #tpu.pipeline_mode<synchronous>, transform_indices = @transform_1, window_bounds = array<i64: 8, 8>}, {pipeline_mode = #tpu.pipeline_mode<synchronous>, transform_indices = @transform_2, window_bounds = array<i64: 9, 8, 8>}, {pipeline_mode = #tpu.pipeline_mode<synchronous>, transform_indices = @transform_3, window_bounds = array<i64: 4, 8>}, {pipeline_mode = #tpu.pipeline_mode<synchronous>, transform_indices = @transform_4, window_bounds = array<i64: 4, 8>}, {transform_indices = @transform_5, window_bounds = array<i64: 2>}, {transform_indices = @transform_6, window_bounds = array<i64: 1, 4, 4, 256>}]} {
    %c0 = arith.constant 0 : index
    %0 = memref.load %arg6[%c0] : memref<2xf32, #tpu.memory_space<smem>>
    %c1 = arith.constant 1 : index
    %1 = memref.load %arg6[%c1] : memref<2xf32, #tpu.memory_space<smem>>
    %c0_0 = arith.constant 0 : index
    %c0_1 = arith.constant 0 : index
    %c0_2 = arith.constant 0 : index
    %2 = vector.load %arg1[%c0_0, %c0_1, %c0_2] : memref<1x8x256xf32, #tpu.memory_space<vmem>>, vector<1x8x256xf32>
    %3 = vector.shape_cast %2 : vector<1x8x256xf32> to vector<8x256xf32>
    %c0_3 = arith.constant 0 : index
    %c0_4 = arith.constant 0 : index
    %4 = vector.load %arg2[%c0_3, %c0_4] : memref<8x8xf32, #tpu.memory_space<vmem>>, vector<8x8xf32>
    %cst = arith.constant dense<0.000000e+00> : vector<8x256xf32>
    %5 = tpu.matmul %4, %3, %cst {dimension_numbers = #tpu.dot_dimension_numbers<[1], [0], [0], [1], [0, 0, 1, 1], [], []>} : vector<8x8xf32>, vector<8x256xf32>, vector<8x256xf32> -> vector<8x256xf32>
    %cst_5 = arith.constant 0.000000e+00 : f32
    %6 = vector.broadcast %cst_5 : f32 to vector<8x256xf32>
    %7 = arith.cmpf oge, %5, %6 : vector<8x256xf32>
    %8 = vector.broadcast %0 : f32 to vector<8x256xf32>
    %9 = arith.mulf %8, %5 : vector<8x256xf32>
    %10 = arith.select %7, %5, %9 : vector<8x256xi1>, vector<8x256xf32>
    %c0_6 = arith.constant 0 : index
    %c0_7 = arith.constant 0 : index
    %11 = vector.load %arg8[%c0_6, %c0_7] : memref<8x273xf32, #tpu.memory_space<vmem>>, vector<8x256xf32>
    tpu.vector_store %arg8[%c0_6, %c0_7], %10 {strides = array<i32>} : memref<8x273xf32, #tpu.memory_space<vmem>>, vector<8x256xf32>,
    %cst_8 = arith.constant 0.000000e+00 : f32
    %12 = vector.broadcast %cst_8 : f32 to vector<8x17xf32>
    %c0_9 = arith.constant 0 : index
    %c256 = arith.constant 256 : index
    %13 = vector.load %arg8[%c0_9, %c256] : memref<8x273xf32, #tpu.memory_space<vmem>>, vector<8x17xf32>
    tpu.vector_store %arg8[%c0_9, %c256], %12 {strides = array<i32>} : memref<8x273xf32, #tpu.memory_space<vmem>>, vector<8x17xf32>,
    %14 = tpu.iota {dimensions = array<i32: 1>} : vector<8x256xi32>
    %c16_i32 = arith.constant 16 : i32
    %c0_i32 = arith.constant 0 : i32
    %15 = arith.cmpi eq, %c16_i32, %c0_i32 : i32
    %c1_i32 = arith.constant 1 : i32
    %16 = arith.select %15, %c1_i32, %c16_i32 : i32
    %17 = vector.broadcast %16 : i32 to vector<8x256xi32>
    %18 = arith.remsi %14, %17 : vector<8x256xi32>
    %c0_i32_10 = arith.constant 0 : i32
    %19 = vector.broadcast %c0_i32_10 : i32 to vector<8x256xi32>
    %20 = arith.cmpi ne, %18, %19 : vector<8x256xi32>
    %c0_i32_11 = arith.constant 0 : i32
    %21 = vector.broadcast %c0_i32_11 : i32 to vector<8x256xi32>
    %22 = arith.cmpi slt, %18, %21 : vector<8x256xi32>
    %c0_i32_12 = arith.constant 0 : i32
    %23 = arith.cmpi slt, %16, %c0_i32_12 : i32
    %24 = vector.broadcast %23 : i1 to vector<8x256xi1>
    %25 = vector.broadcast %24 : vector<8x256xi1> to vector<8x256xi1>
    %26 = arith.xori %22, %25 : vector<8x256xi1>
    %27 = arith.andi %26, %20 : vector<8x256xi1>
    %28 = vector.broadcast %16 : i32 to vector<8x256xi32>
    %29 = arith.addi %18, %28 : vector<8x256xi32>
    %30 = arith.select %27, %29, %18 : vector<8x256xi1>, vector<8x256xi32>
    %c15_i32 = arith.constant 15 : i32
    %31 = vector.broadcast %c15_i32 : i32 to vector<8x256xi32>
    %32 = arith.cmpi ne, %30, %31 : vector<8x256xi32>
    %c0_13 = arith.constant 0 : index
    %c1_14 = arith.constant 1 : index
    %33 = vector.load %arg8[%c0_13, %c1_14] : memref<8x273xf32, #tpu.memory_space<vmem>>, vector<8x256xf32>
    %cst_15 = arith.constant 0.000000e+00 : f32
    %34 = vector.broadcast %cst_15 : f32 to vector<8x256xf32>
    %35 = arith.select %32, %33, %34 : vector<8x256xi1>, vector<8x256xf32>
    %c0_16 = arith.constant 0 : index
    %c16 = arith.constant 16 : index
    %36 = vector.load %arg8[%c0_16, %c16] : memref<8x273xf32, #tpu.memory_space<vmem>>, vector<8x256xf32>
    %c0_17 = arith.constant 0 : index
    %c17 = arith.constant 17 : index
    %37 = vector.load %arg8[%c0_17, %c17] : memref<8x273xf32, #tpu.memory_space<vmem>>, vector<8x256xf32>
    %cst_18 = arith.constant 0.000000e+00 : f32
    %38 = vector.broadcast %cst_18 : f32 to vector<8x256xf32>
    %39 = arith.select %32, %37, %38 : vector<8x256xi1>, vector<8x256xf32>
    %c0_19 = arith.constant 0 : index
    %c0_20 = arith.constant 0 : index
    %40 = vector.load %arg5[%c0_19, %c0_20] : memref<4x8xf32, #tpu.memory_space<vmem>>, vector<4x8xf32>
    %cst_21 = arith.constant dense<0.000000e+00> : vector<4x256xf32>
    %41 = tpu.matmul %40, %3, %cst_21 {dimension_numbers = #tpu.dot_dimension_numbers<[1], [0], [0], [1], [0, 0, 1, 1], [], []>} : vector<4x8xf32>, vector<8x256xf32>, vector<4x256xf32> -> vector<4x256xf32>
    %c0_22 = arith.constant 0 : index
    %c16_23 = arith.constant 16 : index
    %42 = vector.load %arg9[%c0_22, %c16_23] : memref<4x288xf32, #tpu.memory_space<vmem>>, vector<4x256xf32>
    tpu.vector_store %arg9[%c0_22, %c16_23], %41 {strides = array<i32>} : memref<4x288xf32, #tpu.memory_space<vmem>>, vector<4x256xf32>,
    %43 = vector.extract_strided_slice %41 {offsets = [0, 0], sizes = [4, 16], strides = [1, 1]} : vector<4x256xf32> to vector<4x16xf32>
    %c0_24 = arith.constant 0 : index
    %c0_25 = arith.constant 0 : index
    %44 = vector.load %arg9[%c0_24, %c0_25] : memref<4x288xf32, #tpu.memory_space<vmem>>, vector<4x16xf32>
    tpu.vector_store %arg9[%c0_24, %c0_25], %43 {strides = array<i32>} : memref<4x288xf32, #tpu.memory_space<vmem>>, vector<4x16xf32>,
    %45 = vector.extract_strided_slice %41 {offsets = [0, 240], sizes = [4, 16], strides = [1, 1]} : vector<4x256xf32> to vector<4x16xf32>
    %c0_26 = arith.constant 0 : index
    %c272 = arith.constant 272 : index
    %46 = vector.load %arg9[%c0_26, %c272] : memref<4x288xf32, #tpu.memory_space<vmem>>, vector<4x16xf32>
    tpu.vector_store %arg9[%c0_26, %c272], %45 {strides = array<i32>} : memref<4x288xf32, #tpu.memory_space<vmem>>, vector<4x16xf32>,
    %c0_27 = arith.constant 0 : index
    %c0_28 = arith.constant 0 : index
    %47 = vector.load %arg9[%c0_27, %c0_28] : memref<4x288xf32, #tpu.memory_space<vmem>>, vector<4x256xf32>
    %c0_29 = arith.constant 0 : index
    %c32 = arith.constant 32 : index
    %48 = vector.load %arg9[%c0_29, %c32] : memref<4x288xf32, #tpu.memory_space<vmem>>, vector<4x256xf32>
    %cst_30 = arith.constant 7.500000e-01 : f32
    %49 = vector.broadcast %cst_30 : f32 to vector<4x256xf32>
    %50 = arith.mulf %49, %41 : vector<4x256xf32>
    %cst_31 = arith.constant 2.500000e-01 : f32
    %51 = vector.broadcast %cst_31 : f32 to vector<4x256xf32>
    %52 = arith.mulf %51, %47 : vector<4x256xf32>
    %53 = arith.addf %50, %52 : vector<4x256xf32>
    %cst_32 = arith.constant 7.500000e-01 : f32
    %54 = vector.broadcast %cst_32 : f32 to vector<4x256xf32>
    %55 = arith.mulf %54, %41 : vector<4x256xf32>
    %cst_33 = arith.constant 2.500000e-01 : f32
    %56 = vector.broadcast %cst_33 : f32 to vector<4x256xf32>
    %57 = arith.mulf %56, %48 : vector<4x256xf32>
    %58 = arith.addf %55, %57 : vector<4x256xf32>
    %cst_34 = arith.constant 0.000000e+00 : f32
    %59 = vector.broadcast %cst_34 : f32 to vector<2x4x1xf32>
    %c0_35 = arith.constant 0 : index
    %c0_36 = arith.constant 0 : index
    %c0_37 = arith.constant 0 : index
    %60 = vector.load %arg10[%c0_35, %c0_36, %c0_37] : memref<2x4x258xf32, #tpu.memory_space<vmem>>, vector<2x4x1xf32>
    tpu.vector_store %arg10[%c0_35, %c0_36, %c0_37], %59 {strides = array<i32>} : memref<2x4x258xf32, #tpu.memory_space<vmem>>, vector<2x4x1xf32>,
    %cst_38 = arith.constant 0.000000e+00 : f32
    %61 = vector.broadcast %cst_38 : f32 to vector<2x4x1xf32>
    %c0_39 = arith.constant 0 : index
    %c0_40 = arith.constant 0 : index
    %c257 = arith.constant 257 : index
    %62 = vector.load %arg10[%c0_39, %c0_40, %c257] : memref<2x4x258xf32, #tpu.memory_space<vmem>>, vector<2x4x1xf32>
    tpu.vector_store %arg10[%c0_39, %c0_40, %c257], %61 {strides = array<i32>} : memref<2x4x258xf32, #tpu.memory_space<vmem>>, vector<2x4x1xf32>,
    %c0_41 = arith.constant 0 : index
    %c0_42 = arith.constant 0 : index
    %c1_43 = arith.constant 1 : index
    %63 = vector.load %arg10[%c0_41, %c0_42, %c1_43] : memref<2x4x258xf32, #tpu.memory_space<vmem>>, vector<1x4x256xf32>
    %64 = vector.shape_cast %63 : vector<1x4x256xf32> to vector<4x256xf32>
    %65 = vector.shape_cast %53 : vector<4x256xf32> to vector<1x4x256xf32>
    tpu.vector_store %arg10[%c0_41, %c0_42, %c1_43], %65 {strides = array<i32>} : memref<2x4x258xf32, #tpu.memory_space<vmem>>, vector<1x4x256xf32>,
    %c1_44 = arith.constant 1 : index
    %c0_45 = arith.constant 0 : index
    %c1_46 = arith.constant 1 : index
    %66 = vector.load %arg10[%c1_44, %c0_45, %c1_46] : memref<2x4x258xf32, #tpu.memory_space<vmem>>, vector<1x4x256xf32>
    %67 = vector.shape_cast %66 : vector<1x4x256xf32> to vector<4x256xf32>
    %68 = vector.shape_cast %58 : vector<4x256xf32> to vector<1x4x256xf32>
    tpu.vector_store %arg10[%c1_44, %c0_45, %c1_46], %68 {strides = array<i32>} : memref<2x4x258xf32, #tpu.memory_space<vmem>>, vector<1x4x256xf32>,
    %69 = tpu.iota {dimensions = array<i32: 1>} : vector<4x256xi32>
    %c16_i32_47 = arith.constant 16 : i32
    %c0_i32_48 = arith.constant 0 : i32
    %70 = arith.cmpi eq, %c16_i32_47, %c0_i32_48 : i32
    %c1_i32_49 = arith.constant 1 : i32
    %71 = arith.select %70, %c1_i32_49, %c16_i32_47 : i32
    %72 = vector.broadcast %71 : i32 to vector<4x256xi32>
    %73 = arith.remsi %69, %72 : vector<4x256xi32>
    %c0_i32_50 = arith.constant 0 : i32
    %74 = vector.broadcast %c0_i32_50 : i32 to vector<4x256xi32>
    %75 = arith.cmpi ne, %73, %74 : vector<4x256xi32>
    %c0_i32_51 = arith.constant 0 : i32
    %76 = vector.broadcast %c0_i32_51 : i32 to vector<4x256xi32>
    %77 = arith.cmpi slt, %73, %76 : vector<4x256xi32>
    %c0_i32_52 = arith.constant 0 : i32
    %78 = arith.cmpi slt, %71, %c0_i32_52 : i32
    %79 = vector.broadcast %78 : i1 to vector<4x256xi1>
    %80 = vector.broadcast %79 : vector<4x256xi1> to vector<4x256xi1>
    %81 = arith.xori %77, %80 : vector<4x256xi1>
    %82 = arith.andi %81, %75 : vector<4x256xi1>
    %83 = vector.broadcast %71 : i32 to vector<4x256xi32>
    %84 = arith.addi %73, %83 : vector<4x256xi32>
    %85 = arith.select %82, %84, %73 : vector<4x256xi1>, vector<4x256xi32>
    %c0_i32_53 = arith.constant 0 : i32
    %86 = vector.broadcast %c0_i32_53 : i32 to vector<4x256xi32>
    %87 = arith.cmpi eq, %85, %86 : vector<4x256xi32>
    %c15_i32_54 = arith.constant 15 : i32
    %88 = vector.broadcast %c15_i32_54 : i32 to vector<4x256xi32>
    %89 = arith.cmpi eq, %85, %88 : vector<4x256xi32>
    %c0_55 = arith.constant 0 : index
    %c0_56 = arith.constant 0 : index
    %c0_57 = arith.constant 0 : index
    %90 = vector.load %arg10[%c0_55, %c0_56, %c0_57] : memref<2x4x258xf32, #tpu.memory_space<vmem>>, vector<1x4x256xf32>
    %91 = vector.shape_cast %90 : vector<1x4x256xf32> to vector<4x256xf32>
    %92 = arith.select %87, %53, %91 : vector<4x256xi1>, vector<4x256xf32>
    %c0_58 = arith.constant 0 : index
    %c0_59 = arith.constant 0 : index
    %c2 = arith.constant 2 : index
    %93 = vector.load %arg10[%c0_58, %c0_59, %c2] : memref<2x4x258xf32, #tpu.memory_space<vmem>>, vector<1x4x256xf32>
    %94 = vector.shape_cast %93 : vector<1x4x256xf32> to vector<4x256xf32>
    %95 = arith.select %89, %53, %94 : vector<4x256xi1>, vector<4x256xf32>
    %cst_60 = arith.constant 7.500000e-01 : f32
    %96 = vector.broadcast %cst_60 : f32 to vector<4x256xf32>
    %97 = arith.mulf %96, %53 : vector<4x256xf32>
    %cst_61 = arith.constant 2.500000e-01 : f32
    %98 = vector.broadcast %cst_61 : f32 to vector<4x256xf32>
    %99 = arith.mulf %98, %92 : vector<4x256xf32>
    %100 = arith.addf %97, %99 : vector<4x256xf32>
    %cst_62 = arith.constant 7.500000e-01 : f32
    %101 = vector.broadcast %cst_62 : f32 to vector<4x256xf32>
    %102 = arith.mulf %101, %53 : vector<4x256xf32>
    %cst_63 = arith.constant 2.500000e-01 : f32
    %103 = vector.broadcast %cst_63 : f32 to vector<4x256xf32>
    %104 = arith.mulf %103, %95 : vector<4x256xf32>
    %105 = arith.addf %102, %104 : vector<4x256xf32>
    %c1_64 = arith.constant 1 : index
    %c0_65 = arith.constant 0 : index
    %c0_66 = arith.constant 0 : index
    %106 = vector.load %arg10[%c1_64, %c0_65, %c0_66] : memref<2x4x258xf32, #tpu.memory_space<vmem>>, vector<1x4x256xf32>
    %107 = vector.shape_cast %106 : vector<1x4x256xf32> to vector<4x256xf32>
    %108 = arith.select %87, %58, %107 : vector<4x256xi1>, vector<4x256xf32>
    %c1_67 = arith.constant 1 : index
    %c0_68 = arith.constant 0 : index
    %c2_69 = arith.constant 2 : index
    %109 = vector.load %arg10[%c1_67, %c0_68, %c2_69] : memref<2x4x258xf32, #tpu.memory_space<vmem>>, vector<1x4x256xf32>
    %110 = vector.shape_cast %109 : vector<1x4x256xf32> to vector<4x256xf32>
    %111 = arith.select %89, %58, %110 : vector<4x256xi1>, vector<4x256xf32>
    %cst_70 = arith.constant 7.500000e-01 : f32
    %112 = vector.broadcast %cst_70 : f32 to vector<4x256xf32>
    %113 = arith.mulf %112, %58 : vector<4x256xf32>
    %cst_71 = arith.constant 2.500000e-01 : f32
    %114 = vector.broadcast %cst_71 : f32 to vector<4x256xf32>
    %115 = arith.mulf %114, %108 : vector<4x256xf32>
    %116 = arith.addf %113, %115 : vector<4x256xf32>
    %cst_72 = arith.constant 7.500000e-01 : f32
    %117 = vector.broadcast %cst_72 : f32 to vector<4x256xf32>
    %118 = arith.mulf %117, %58 : vector<4x256xf32>
    %cst_73 = arith.constant 2.500000e-01 : f32
    %119 = vector.broadcast %cst_73 : f32 to vector<4x256xf32>
    %120 = arith.mulf %119, %111 : vector<4x256xf32>
    %121 = arith.addf %118, %120 : vector<4x256xf32>
    %c0_74 = arith.constant 0 : index
    %c0_75 = arith.constant 0 : index
    %122 = vector.load %arg4[%c0_74, %c0_75] : memref<4x8xf32, #tpu.memory_space<vmem>>, vector<4x8xf32>
    %c4 = arith.constant 4 : index
    %c0_76 = arith.constant 0 : index
    %c0_77 = arith.constant 0 : index
    %123 = vector.load %arg3[%c4, %c0_76, %c0_77] : memref<9x8x8xf32, #tpu.memory_space<vmem>>, vector<1x8x8xf32>
    %124 = vector.shape_cast %123 : vector<1x8x8xf32> to vector<8x8xf32>
    %cst_78 = arith.constant dense<0.000000e+00> : vector<8x256xf32>
    %125 = tpu.matmul %124, %10, %cst_78 {dimension_numbers = #tpu.dot_dimension_numbers<[1], [0], [0], [1], [0, 0, 1, 1], [], []>} : vector<8x8xf32>, vector<8x256xf32>, vector<8x256xf32> -> vector<8x256xf32>
    %cst_79 = arith.constant 0.000000e+00 : f32
    %126 = vector.broadcast %cst_79 : f32 to vector<8x256xf32>
    %127 = arith.cmpf oge, %125, %126 : vector<8x256xf32>
    %128 = vector.broadcast %1 : f32 to vector<8x256xf32>
    %129 = arith.mulf %128, %125 : vector<8x256xf32>
    %130 = arith.select %127, %125, %129 : vector<8x256xi1>, vector<8x256xf32>
    %cst_80 = arith.constant dense<0.000000e+00> : vector<4x256xf32>
    %131 = tpu.matmul %122, %130, %cst_80 {dimension_numbers = #tpu.dot_dimension_numbers<[1], [0], [0], [1], [0, 0, 1, 1], [], []>} : vector<4x8xf32>, vector<8x256xf32>, vector<4x256xf32> -> vector<4x256xf32>
    %132 = arith.addf %131, %100 : vector<4x256xf32>
    %c0_81 = arith.constant 0 : index
    %c0_82 = arith.constant 0 : index
    %c0_83 = arith.constant 0 : index
    %c0_84 = arith.constant 0 : index
    %133 = vector.load %arg7[%c0_81, %c0_82, %c0_83, %c0_84] : memref<1x4x4x256xf32, #tpu.memory_space<vmem>>, vector<1x1x4x256xf32>
    %134 = vector.shape_cast %133 : vector<1x1x4x256xf32> to vector<4x256xf32>
    %135 = vector.shape_cast %132 : vector<4x256xf32> to vector<1x1x4x256xf32>
    tpu.vector_store %arg7[%c0_81, %c0_82, %c0_83, %c0_84], %135 {strides = array<i32>} : memref<1x4x4x256xf32, #tpu.memory_space<vmem>>, vector<1x1x4x256xf32>,
    %c5 = arith.constant 5 : index
    %c0_85 = arith.constant 0 : index
    %c0_86 = arith.constant 0 : index
    %136 = vector.load %arg3[%c5, %c0_85, %c0_86] : memref<9x8x8xf32, #tpu.memory_space<vmem>>, vector<1x8x8xf32>
    %137 = vector.shape_cast %136 : vector<1x8x8xf32> to vector<8x8xf32>
    %cst_87 = arith.constant dense<0.000000e+00> : vector<8x256xf32>
    %138 = tpu.matmul %137, %10, %cst_87 {dimension_numbers = #tpu.dot_dimension_numbers<[1], [0], [0], [1], [0, 0, 1, 1], [], []>} : vector<8x8xf32>, vector<8x256xf32>, vector<8x256xf32> -> vector<8x256xf32>
    %c3 = arith.constant 3 : index
    %c0_88 = arith.constant 0 : index
    %c0_89 = arith.constant 0 : index
    %139 = vector.load %arg3[%c3, %c0_88, %c0_89] : memref<9x8x8xf32, #tpu.memory_space<vmem>>, vector<1x8x8xf32>
    %140 = vector.shape_cast %139 : vector<1x8x8xf32> to vector<8x8xf32>
    %cst_90 = arith.constant dense<0.000000e+00> : vector<8x256xf32>
    %141 = tpu.matmul %140, %35, %cst_90 {dimension_numbers = #tpu.dot_dimension_numbers<[1], [0], [0], [1], [0, 0, 1, 1], [], []>} : vector<8x8xf32>, vector<8x256xf32>, vector<8x256xf32> -> vector<8x256xf32>
    %142 = arith.addf %138, %141 : vector<8x256xf32>
    %cst_91 = arith.constant 0.000000e+00 : f32
    %143 = vector.broadcast %cst_91 : f32 to vector<8x256xf32>
    %144 = arith.cmpf oge, %142, %143 : vector<8x256xf32>
    %145 = vector.broadcast %1 : f32 to vector<8x256xf32>
    %146 = arith.mulf %145, %142 : vector<8x256xf32>
    %147 = arith.select %144, %142, %146 : vector<8x256xi1>, vector<8x256xf32>
    %cst_92 = arith.constant dense<0.000000e+00> : vector<4x256xf32>
    %148 = tpu.matmul %122, %147, %cst_92 {dimension_numbers = #tpu.dot_dimension_numbers<[1], [0], [0], [1], [0, 0, 1, 1], [], []>} : vector<4x8xf32>, vector<8x256xf32>, vector<4x256xf32> -> vector<4x256xf32>
    %149 = arith.addf %148, %105 : vector<4x256xf32>
    %c0_93 = arith.constant 0 : index
    %c1_94 = arith.constant 1 : index
    %c0_95 = arith.constant 0 : index
    %c0_96 = arith.constant 0 : index
    %150 = vector.load %arg7[%c0_93, %c1_94, %c0_95, %c0_96] : memref<1x4x4x256xf32, #tpu.memory_space<vmem>>, vector<1x1x4x256xf32>
    %151 = vector.shape_cast %150 : vector<1x1x4x256xf32> to vector<4x256xf32>
    %152 = vector.shape_cast %149 : vector<4x256xf32> to vector<1x1x4x256xf32>
    tpu.vector_store %arg7[%c0_93, %c1_94, %c0_95, %c0_96], %152 {strides = array<i32>} : memref<1x4x4x256xf32, #tpu.memory_space<vmem>>, vector<1x1x4x256xf32>,
    %c7 = arith.constant 7 : index
    %c0_97 = arith.constant 0 : index
    %c0_98 = arith.constant 0 : index
    %153 = vector.load %arg3[%c7, %c0_97, %c0_98] : memref<9x8x8xf32, #tpu.memory_space<vmem>>, vector<1x8x8xf32>
    %154 = vector.shape_cast %153 : vector<1x8x8xf32> to vector<8x8xf32>
    %cst_99 = arith.constant dense<0.000000e+00> : vector<8x256xf32>
    %155 = tpu.matmul %154, %10, %cst_99 {dimension_numbers = #tpu.dot_dimension_numbers<[1], [0], [0], [1], [0, 0, 1, 1], [], []>} : vector<8x8xf32>, vector<8x256xf32>, vector<8x256xf32> -> vector<8x256xf32>
    %c1_100 = arith.constant 1 : index
    %c0_101 = arith.constant 0 : index
    %c0_102 = arith.constant 0 : index
    %156 = vector.load %arg3[%c1_100, %c0_101, %c0_102] : memref<9x8x8xf32, #tpu.memory_space<vmem>>, vector<1x8x8xf32>
    %157 = vector.shape_cast %156 : vector<1x8x8xf32> to vector<8x8xf32>
    %cst_103 = arith.constant dense<0.000000e+00> : vector<8x256xf32>
    %158 = tpu.matmul %157, %36, %cst_103 {dimension_numbers = #tpu.dot_dimension_numbers<[1], [0], [0], [1], [0, 0, 1, 1], [], []>} : vector<8x8xf32>, vector<8x256xf32>, vector<8x256xf32> -> vector<8x256xf32>
    %159 = arith.addf %155, %158 : vector<8x256xf32>
    %cst_104 = arith.constant 0.000000e+00 : f32
    %160 = vector.broadcast %cst_104 : f32 to vector<8x256xf32>
    %161 = arith.cmpf oge, %159, %160 : vector<8x256xf32>
    %162 = vector.broadcast %1 : f32 to vector<8x256xf32>
    %163 = arith.mulf %162, %159 : vector<8x256xf32>
    %164 = arith.select %161, %159, %163 : vector<8x256xi1>, vector<8x256xf32>
    %cst_105 = arith.constant dense<0.000000e+00> : vector<4x256xf32>
    %165 = tpu.matmul %122, %164, %cst_105 {dimension_numbers = #tpu.dot_dimension_numbers<[1], [0], [0], [1], [0, 0, 1, 1], [], []>} : vector<4x8xf32>, vector<8x256xf32>, vector<4x256xf32> -> vector<4x256xf32>
    %166 = arith.addf %165, %116 : vector<4x256xf32>
    %c0_106 = arith.constant 0 : index
    %c2_107 = arith.constant 2 : index
    %c0_108 = arith.constant 0 : index
    %c0_109 = arith.constant 0 : index
    %167 = vector.load %arg7[%c0_106, %c2_107, %c0_108, %c0_109] : memref<1x4x4x256xf32, #tpu.memory_space<vmem>>, vector<1x1x4x256xf32>
    %168 = vector.shape_cast %167 : vector<1x1x4x256xf32> to vector<4x256xf32>
    %169 = vector.shape_cast %166 : vector<4x256xf32> to vector<1x1x4x256xf32>
    tpu.vector_store %arg7[%c0_106, %c2_107, %c0_108, %c0_109], %169 {strides = array<i32>} : memref<1x4x4x256xf32, #tpu.memory_space<vmem>>, vector<1x1x4x256xf32>,
    %c8 = arith.constant 8 : index
    %c0_110 = arith.constant 0 : index
    %c0_111 = arith.constant 0 : index
    %170 = vector.load %arg3[%c8, %c0_110, %c0_111] : memref<9x8x8xf32, #tpu.memory_space<vmem>>, vector<1x8x8xf32>
    %171 = vector.shape_cast %170 : vector<1x8x8xf32> to vector<8x8xf32>
    %cst_112 = arith.constant dense<0.000000e+00> : vector<8x256xf32>
    %172 = tpu.matmul %171, %10, %cst_112 {dimension_numbers = #tpu.dot_dimension_numbers<[1], [0], [0], [1], [0, 0, 1, 1], [], []>} : vector<8x8xf32>, vector<8x256xf32>, vector<8x256xf32> -> vector<8x256xf32>
    %c6 = arith.constant 6 : index
    %c0_113 = arith.constant 0 : index
    %c0_114 = arith.constant 0 : index
    %173 = vector.load %arg3[%c6, %c0_113, %c0_114] : memref<9x8x8xf32, #tpu.memory_space<vmem>>, vector<1x8x8xf32>
    %174 = vector.shape_cast %173 : vector<1x8x8xf32> to vector<8x8xf32>
    %cst_115 = arith.constant dense<0.000000e+00> : vector<8x256xf32>
    %175 = tpu.matmul %174, %35, %cst_115 {dimension_numbers = #tpu.dot_dimension_numbers<[1], [0], [0], [1], [0, 0, 1, 1], [], []>} : vector<8x8xf32>, vector<8x256xf32>, vector<8x256xf32> -> vector<8x256xf32>
    %176 = arith.addf %172, %175 : vector<8x256xf32>
    %c2_116 = arith.constant 2 : index
    %c0_117 = arith.constant 0 : index
    %c0_118 = arith.constant 0 : index
    %177 = vector.load %arg3[%c2_116, %c0_117, %c0_118] : memref<9x8x8xf32, #tpu.memory_space<vmem>>, vector<1x8x8xf32>
    %178 = vector.shape_cast %177 : vector<1x8x8xf32> to vector<8x8xf32>
    %cst_119 = arith.constant dense<0.000000e+00> : vector<8x256xf32>
    %179 = tpu.matmul %178, %36, %cst_119 {dimension_numbers = #tpu.dot_dimension_numbers<[1], [0], [0], [1], [0, 0, 1, 1], [], []>} : vector<8x8xf32>, vector<8x256xf32>, vector<8x256xf32> -> vector<8x256xf32>
    %180 = arith.addf %176, %179 : vector<8x256xf32>
    %c0_120 = arith.constant 0 : index
    %c0_121 = arith.constant 0 : index
    %c0_122 = arith.constant 0 : index
    %181 = vector.load %arg3[%c0_120, %c0_121, %c0_122] : memref<9x8x8xf32, #tpu.memory_space<vmem>>, vector<1x8x8xf32>
    %182 = vector.shape_cast %181 : vector<1x8x8xf32> to vector<8x8xf32>
    %cst_123 = arith.constant dense<0.000000e+00> : vector<8x256xf32>
    %183 = tpu.matmul %182, %39, %cst_123 {dimension_numbers = #tpu.dot_dimension_numbers<[1], [0], [0], [1], [0, 0, 1, 1], [], []>} : vector<8x8xf32>, vector<8x256xf32>, vector<8x256xf32> -> vector<8x256xf32>
    %184 = arith.addf %180, %183 : vector<8x256xf32>
    %cst_124 = arith.constant 0.000000e+00 : f32
    %185 = vector.broadcast %cst_124 : f32 to vector<8x256xf32>
    %186 = arith.cmpf oge, %184, %185 : vector<8x256xf32>
    %187 = vector.broadcast %1 : f32 to vector<8x256xf32>
    %188 = arith.mulf %187, %184 : vector<8x256xf32>
    %189 = arith.select %186, %184, %188 : vector<8x256xi1>, vector<8x256xf32>
    %cst_125 = arith.constant dense<0.000000e+00> : vector<4x256xf32>
    %190 = tpu.matmul %122, %189, %cst_125 {dimension_numbers = #tpu.dot_dimension_numbers<[1], [0], [0], [1], [0, 0, 1, 1], [], []>} : vector<4x8xf32>, vector<8x256xf32>, vector<4x256xf32> -> vector<4x256xf32>
    %191 = arith.addf %190, %121 : vector<4x256xf32>
    %c0_126 = arith.constant 0 : index
    %c3_127 = arith.constant 3 : index
    %c0_128 = arith.constant 0 : index
    %c0_129 = arith.constant 0 : index
    %192 = vector.load %arg7[%c0_126, %c3_127, %c0_128, %c0_129] : memref<1x4x4x256xf32, #tpu.memory_space<vmem>>, vector<1x1x4x256xf32>
    %193 = vector.shape_cast %192 : vector<1x1x4x256xf32> to vector<4x256xf32>
    %194 = vector.shape_cast %191 : vector<4x256xf32> to vector<1x1x4x256xf32>
    tpu.vector_store %arg7[%c0_126, %c3_127, %c0_128, %c0_129], %194 {strides = array<i32>} : memref<1x4x4x256xf32, #tpu.memory_space<vmem>>, vector<1x1x4x256xf32>,
    return
  }
  func.func @transform_0(%arg0: i32) -> (i32, i32, i32) {
    %c0_i32 = arith.constant 0 : i32
    %c0_i32_0 = arith.constant 0 : i32
    %c0_i32_1 = arith.constant 0 : i32
    return %arg0, %c0_i32, %c0_i32_0 : i32, i32, i32
  }
  func.func @transform_1(%arg0: i32) -> (i32, i32) {
    %c0_i32 = arith.constant 0 : i32
    %c0_i32_0 = arith.constant 0 : i32
    %c0_i32_1 = arith.constant 0 : i32
    return %c0_i32, %c0_i32_0 : i32, i32
  }
  func.func @transform_2(%arg0: i32) -> (i32, i32, i32) {
    %c0_i32 = arith.constant 0 : i32
    %c0_i32_0 = arith.constant 0 : i32
    %c0_i32_1 = arith.constant 0 : i32
    %c0_i32_2 = arith.constant 0 : i32
    return %c0_i32, %c0_i32_0, %c0_i32_1 : i32, i32, i32
  }
  func.func @transform_3(%arg0: i32) -> (i32, i32) {
    %c0_i32 = arith.constant 0 : i32
    %c0_i32_0 = arith.constant 0 : i32
    %c0_i32_1 = arith.constant 0 : i32
    return %c0_i32, %c0_i32_0 : i32, i32
  }
  func.func @transform_4(%arg0: i32) -> (i32, i32) {
    %c0_i32 = arith.constant 0 : i32
    %c0_i32_0 = arith.constant 0 : i32
    %c0_i32_1 = arith.constant 0 : i32
    return %c0_i32, %c0_i32_0 : i32, i32
  }
  func.func @transform_5(%arg0: i32) -> i32 {
    %c0_i32 = arith.constant 0 : i32
    %c0_i32_0 = arith.constant 0 : i32
    return %c0_i32 : i32
  }
  func.func @transform_6(%arg0: i32) -> (i32, i32, i32, i32) {
    %c0_i32 = arith.constant 0 : i32
    %c0_i32_0 = arith.constant 0 : i32
    %c0_i32_1 = arith.constant 0 : i32
    %c0_i32_2 = arith.constant 0 : i32
    return %arg0, %c0_i32, %c0_i32_0, %c0_i32_1 : i32, i32, i32, i32
  }
}

</mosaic_0001>

<llo_original>
// kernel: tpu_custom_call.1
$region0: #{tpu_custom_call.1}
  #allocation0 [shape = 'u32[]', space=smem, size = 0x4, offset = 0x4, fixed_abs, tag = 'smem constant byte address 0x4 - core index']
  #allocation1 [shape = 'u32[144,128]{1,0:T(1,128)}', space=vmem, size = 0x12000, scoped, tag = 'internal scratch']
  #allocation2 [shape = 'f32[8,273]{1,0:T(8,128)}', space=vmem, size = 0x3000, scoped, tag = 'scratch operand']
  #allocation3 [shape = 'f32[4,288]{1,0:T(4,128)}', space=vmem, size = 0x1800, scoped, tag = 'scratch operand']
  #allocation4 [shape = 'f32[2,4,258]{2,1,0:T(4,128)}', space=vmem, size = 0x3000, scoped, tag = 'scratch operand']
  %s0 = inlined_call_operand.vmem [shape: f32[2,8,256], index: 0, kind: input, shape index: {}]
  %s1 = inlined_call_operand.vmem [shape: f32[8,8], index: 1, kind: input, shape index: {}]
  %s2 = inlined_call_operand.vmem [shape: f32[9,8,8], index: 2, kind: input, shape index: {}]
  %s3 = inlined_call_operand.vmem [shape: f32[4,8], index: 3, kind: input, shape index: {}]
  %s4 = inlined_call_operand.vmem [shape: f32[4,8], index: 4, kind: input, shape index: {}]
  %s5 = inlined_call_operand.vmem [shape: f32[2], index: 5, kind: input, shape index: {}]
  %s6 = inlined_call_operand.hbm [shape: f32[2,4,4,256], index: 6, kind: output, shape index: {}]
  %s7 = sld [smem:[#allocation0]]
  $region61: #{tpu_custom_call.1} parent=0
    _
  %s9 = ssub.s32 1, %s7
  %s10 = scalar_select 0, %s9, %s7
  $region1: #{tpu_custom_call.1} parent=0
    #allocation5 [shape = 'u8[512]{0}', space=smem, size = 0x200, scoped, tag = 'input window, operand 5, single buffered']
    #allocation6 [shape = 's32[2]{0}', space=sflag, size = 0x8, scoped, tag = 'scoped memory for tpu_custom_call.1']
    #allocation7 [shape = 's32[2]{0}', space=sflag, size = 0x8, scoped, tag = 'scoped memory for tpu_custom_call.1']
    #allocation8 [shape = 'u8[32768]{0}', space=vmem, size = 0x8000, scoped, tag = 'output window, operand 0']
    %11 = vsyncpa [#allocation7], 0
    %12 = vsyncpa [#allocation6], 0
    %s13 = scalar_lea.sflag [#allocation6], 1
    %14 = vsyncpa %s13, 0
    loop: start=0, step=1, limit=4
    $region2: #{tpu_custom_call.1} parent=1 // loop_pre_header
      _
    $region3: #{tpu_custom_call.1} parent=1 // loop_header
      %s16 = sphi 0, %s20
      %p17 = scmp.ge.s32.totalorder %s16, 4
      %s26 = sphi 0, %s28
      %s29 = sphi 0, %s26
      %s30 = sphi 0, %s29
      %s46 = sphi 0, %s30
      %s50 = sphi 0, %s50
      %s52 = sphi 0, %s50
      %s53 = sphi 0, %s52
      %s67 = sphi 0, %s53
      %s71 = sphi 0, %s71
      %s73 = sphi 0, %s71
      %s74 = sphi 0, %s73
      %s88 = sphi 0, %s74
      %s92 = sphi 0, %s92
      %s94 = sphi 0, %s92
      %s95 = sphi 0, %s94
      %s109 = sphi 0, %s95
      %s113 = sphi 0, %s113
      %s115 = sphi 0, %s113
      %s116 = sphi 0, %s115
      %s130 = sphi 0, %s116
      %s134 = sphi 0, %s134
      %s136 = sphi 0, %s134
      %s137 = sphi 0, %s136
      %s151 = sphi 0, %s137
      %s157 = sphi 0, %s159
      %s160 = sphi 0, %s157
      %s161 = sphi 0, %s160
      %s177 = sphi 0, %s161
    $region4: #{tpu_custom_call.1} parent=1 // loop_header_branch
      %19 = sbr.rel (%p17) target = $region8
    $region5: #{tpu_custom_call.1} parent=1 // loop_body
      %s21 = ssub.s32 %s16, 1
      %s22 = ssub.s32 %s16, 2
      %s23 = sadd.s32 %s16, 1
      %s24 = ssub.s32 %s16, %s23
      %p25 = scmp.eq.s32.totalorder %s24, 0
      %s27 = sadd.s32 %s26, 1
      %s28 = scalar_select %p25, %s26, %s27
      %p31 = pneg %p25
      %p32 = scmp.eq.s32.totalorder %s16, 1
      %p33 = por %p31, %p32
      %p34 = scmp.ne.s32.totalorder %s26, %s29
      %p35 = scmp.eq.s32.totalorder %s16, 0
      %p36 = por %p34, %p35
      %p37 = scmp.ne.s32.totalorder %s26, %s29
      %p38 = scmp.eq.s32.totalorder %s21, 1
      %p39 = por %p37, %p38
      %p40 = scmp.ne.s32.totalorder %s29, %s30
      %p41 = scmp.eq.s32.totalorder %s21, 0
      %p42 = por %p40, %p41
      %p43 = scmp.ne.s32.totalorder %s29, %s30
      %p44 = scmp.eq.s32.totalorder %s22, 1
      %p45 = por %p43, %p44
      %p47 = scmp.ne.s32.totalorder %s30, %s46
      %p48 = scmp.eq.s32.totalorder %s22, 0
      %p49 = por %p47, %p48
      %s51 = sadd.s32 %s50, 1
      %p54 = scmp.eq.s32.totalorder %s16, 1
      %p55 = scmp.ne.s32.totalorder %s50, %s52
      %p56 = scmp.eq.s32.totalorder %s16, 0
      %p57 = por %p55, %p56
      %p58 = scmp.ne.s32.totalorder %s50, %s52
      %p59 = scmp.eq.s32.totalorder %s21, 1
      %p60 = por %p58, %p59
      %p61 = scmp.ne.s32.totalorder %s52, %s53
      %p62 = scmp.eq.s32.totalorder %s21, 0
      %p63 = por %p61, %p62
      %p64 = scmp.ne.s32.totalorder %s52, %s53
      %p65 = scmp.eq.s32.totalorder %s22, 1
      %p66 = por %p64, %p65
      %p68 = scmp.ne.s32.totalorder %s53, %s67
      %p69 = scmp.eq.s32.totalorder %s22, 0
      %p70 = por %p68, %p69
      %s72 = sadd.s32 %s71, 1
      %p75 = scmp.eq.s32.totalorder %s16, 1
      %p76 = scmp.ne.s32.totalorder %s71, %s73
      %p77 = scmp.eq.s32.totalorder %s16, 0
      %p78 = por %p76, %p77
      %p79 = scmp.ne.s32.totalorder %s71, %s73
      %p80 = scmp.eq.s32.totalorder %s21, 1
      %p81 = por %p79, %p80
      %p82 = scmp.ne.s32.totalorder %s73, %s74
      %p83 = scmp.eq.s32.totalorder %s21, 0
      %p84 = por %p82, %p83
      %p85 = scmp.ne.s32.totalorder %s73, %s74
      %p86 = scmp.eq.s32.totalorder %s22, 1
      %p87 = por %p85, %p86
      %p89 = scmp.ne.s32.totalorder %s74, %s88
      %p90 = scmp.eq.s32.totalorder %s22, 0
      %p91 = por %p89, %p90
      %s93 = sadd.s32 %s92, 1
      %p96 = scmp.eq.s32.totalorder %s16, 1
      %p97 = scmp.ne.s32.totalorder %s92, %s94
      %p98 = scmp.eq.s32.totalorder %s16, 0
      %p99 = por %p97, %p98
      %p100 = scmp.ne.s32.totalorder %s92, %s94
      %p101 = scmp.eq.s32.totalorder %s21, 1
      %p102 = por %p100, %p101
      %p103 = scmp.ne.s32.totalorder %s94, %s95
      %p104 = scmp.eq.s32.totalorder %s21, 0
      %p105 = por %p103, %p104
      %p106 = scmp.ne.s32.totalorder %s94, %s95
      %p107 = scmp.eq.s32.totalorder %s22, 1
      %p108 = por %p106, %p107
      %p110 = scmp.ne.s32.totalorder %s95, %s109
      %p111 = scmp.eq.s32.totalorder %s22, 0
      %p112 = por %p110, %p111
      %s114 = sadd.s32 %s113, 1
      %p117 = scmp.eq.s32.totalorder %s16, 1
      %p118 = scmp.ne.s32.totalorder %s113, %s115
      %p119 = scmp.eq.s32.totalorder %s16, 0
      %p120 = por %p118, %p119
      %p121 = scmp.ne.s32.totalorder %s113, %s115
      %p122 = scmp.eq.s32.totalorder %s21, 1
      %p123 = por %p121, %p122
      %p124 = scmp.ne.s32.totalorder %s115, %s116
      %p125 = scmp.eq.s32.totalorder %s21, 0
      %p126 = por %p124, %p125
      %p127 = scmp.ne.s32.totalorder %s115, %s116
      %p128 = scmp.eq.s32.totalorder %s22, 1
      %p129 = por %p127, %p128
      %p131 = scmp.ne.s32.totalorder %s116, %s130
      %p132 = scmp.eq.s32.totalorder %s22, 0
      %p133 = por %p131, %p132
      %s135 = sadd.s32 %s134, 1
      %p138 = scmp.eq.s32.totalorder %s16, 1
      %p139 = scmp.ne.s32.totalorder %s134, %s136
      %p140 = scmp.eq.s32.totalorder %s16, 0
      %p141 = por %p139, %p140
      %p142 = scmp.ne.s32.totalorder %s134, %s136
      %p143 = scmp.eq.s32.totalorder %s21, 1
      %p144 = por %p142, %p143
      %p145 = scmp.ne.s32.totalorder %s136, %s137
      %p146 = scmp.eq.s32.totalorder %s21, 0
      %p147 = por %p145, %p146
      %p148 = scmp.ne.s32.totalorder %s136, %s137
      %p149 = scmp.eq.s32.totalorder %s22, 1
      %p150 = por %p148, %p149
      %p152 = scmp.ne.s32.totalorder %s137, %s151
      %p153 = scmp.eq.s32.totalorder %s22, 0
      %p154 = por %p152, %p153
      %s155 = ssub.s32 %s16, %s23
      %p156 = scmp.eq.s32.totalorder %s155, 0
      %s158 = sadd.s32 %s157, 1
      %s159 = scalar_select %p156, %s157, %s158
      %p162 = pneg %p156
      %p163 = scmp.eq.s32.totalorder %s16, 1
      %p164 = por %p162, %p163
      %p165 = scmp.ne.s32.totalorder %s157, %s160
      %p166 = scmp.eq.s32.totalorder %s16, 0
      %p167 = por %p165, %p166
      %p168 = scmp.ne.s32.totalorder %s157, %s160
      %p169 = scmp.eq.s32.totalorder %s21, 1
      %p170 = por %p168, %p169
      %p171 = scmp.ne.s32.totalorder %s160, %s161
      %p172 = scmp.eq.s32.totalorder %s21, 0
      %p173 = por %p171, %p172
      %p174 = scmp.ne.s32.totalorder %s160, %s161
      %p175 = scmp.eq.s32.totalorder %s22, 1
      %p176 = por %p174, %p175
      %p178 = scmp.ne.s32.totalorder %s161, %s177
      %p179 = scmp.eq.s32.totalorder %s22, 0
      %p180 = por %p178, %p179
      %p181 = scmp.le.s32.totalorder 1, %s16
      %p182 = scmp.lt.s32.totalorder %s16, 3
      %p183 = pnand %p181, %p182
      %p184 = pneg %p183
      // Predicated region
      $region9: #{tpu_custom_call.1} parent=5 // pred_check
        _
      $region10: #{tpu_custom_call.1} parent=5 // pred_check_branch
        %186 = sbr.rel (%p183) target = $region12
      $region11: #{tpu_custom_call.1} parent=5 // pred_region
        %s187 = ssub.s32 %s16, 1
        // Predicated region
        $region13: #{tpu_custom_call.1} parent=11 // pred_check
          %p188 = pneg %p63
        $region14: #{tpu_custom_call.1} parent=11 // pred_check_branch
          %190 = sbr.rel (%p188) target = $region16
        $region15: #{tpu_custom_call.1} parent=11 // pred_region
          _
        $region16: #{tpu_custom_call.1} parent=11 // pred_fallthru
          _
        // Predicated region
        $region17: #{tpu_custom_call.1} parent=11 // pred_check
          %p191 = pneg %p84
        $region18: #{tpu_custom_call.1} parent=11 // pred_check_branch
          %193 = sbr.rel (%p191) target = $region20
        $region19: #{tpu_custom_call.1} parent=11 // pred_region
          _
        $region20: #{tpu_custom_call.1} parent=11 // pred_fallthru
          _
        // Predicated region
        $region21: #{tpu_custom_call.1} parent=11 // pred_check
          %p194 = pneg %p105
        $region22: #{tpu_custom_call.1} parent=11 // pred_check_branch
          %196 = sbr.rel (%p194) target = $region24
        $region23: #{tpu_custom_call.1} parent=11 // pred_region
          _
        $region24: #{tpu_custom_call.1} parent=11 // pred_fallthru
          _
        // Predicated region
        $region25: #{tpu_custom_call.1} parent=11 // pred_check
          %p197 = pneg %p126
        $region26: #{tpu_custom_call.1} parent=11 // pred_check_branch
          %199 = sbr.rel (%p197) target = $region28
        $region27: #{tpu_custom_call.1} parent=11 // pred_region
          _
        $region28: #{tpu_custom_call.1} parent=11 // pred_fallthru
          _
        // Predicated region
        $region29: #{tpu_custom_call.1} parent=11 // pred_check
          %p200 = pneg %p147
        $region30: #{tpu_custom_call.1} parent=11 // pred_check_branch
          %202 = sbr.rel (%p200) target = $region32
        $region31: #{tpu_custom_call.1} parent=11 // pred_region
          %s204 = ssub.s32 16, 16
          %205 = vsyncadd [#allocation7], %s204
          %s207 = sshll.u32 %s5, 4
          %s208 = int_to_ptr.vmem [resolvable:$true] %s207
          %210 = dma.vmem_to_smem %s208, 16, [#allocation5], [#allocation7]
        $region32: #{tpu_custom_call.1} parent=11 // pred_fallthru
          _
      $region12: #{tpu_custom_call.1} parent=5 // pred_fallthru
        _
      %p211 = scmp.lt.s32.totalorder %s16, 2
      // Predicated region
      $region33: #{tpu_custom_call.1} parent=5 // pred_check
        %p212 = pneg %p211
      $region34: #{tpu_custom_call.1} parent=5 // pred_check_branch
        %214 = sbr.rel (%p212) target = $region36
      $region35: #{tpu_custom_call.1} parent=5 // pred_region
        // Predicated region
        $region37: #{tpu_custom_call.1} parent=35 // pred_check
          %p215 = pneg %p36
        $region38: #{tpu_custom_call.1} parent=35 // pred_check_branch
          %217 = sbr.rel (%p215) target = $region40
        $region39: #{tpu_custom_call.1} parent=35 // pred_region
          %p218 = scmp.lt.s32.totalorder %s16, 1
          %s219 = scalar_select %p218, %s16, 1
          %s220 = smul.addr %s219, 2
          %s221 = smul.addr %s220, 8
          %s222 = scalar_lea.vmem %s0, %s221
        $region40: #{tpu_custom_call.1} parent=35 // pred_fallthru
          _
      $region36: #{tpu_custom_call.1} parent=5 // pred_fallthru
        _
      %p223 = scmp.le.s32.totalorder 1, %s16
      %p224 = scmp.lt.s32.totalorder %s16, 3
      %p225 = pnand %p223, %p224
      %p226 = pneg %p225
      // Predicated region
      $region41: #{tpu_custom_call.1} parent=5 // pred_check
        _
      $region42: #{tpu_custom_call.1} parent=5 // pred_check_branch
        %228 = sbr.rel (%p225) target = $region44
      $region43: #{tpu_custom_call.1} parent=5 // pred_region
        %s229 = ssub.s32 %s16, 1
        // Predicated region
        $region45: #{tpu_custom_call.1} parent=43 // pred_check
          %p230 = pneg %p147
        $region46: #{tpu_custom_call.1} parent=43 // pred_check_branch
          %232 = sbr.rel (%p230) target = $region48
        $region47: #{tpu_custom_call.1} parent=43 // pred_region
          %233 = dma.done [#allocation7], 16
        $region48: #{tpu_custom_call.1} parent=43 // pred_fallthru
          _
        %234 = sfence
        %p235 = scmp.lt.s32.totalorder %s21, 1
        %s236 = scalar_select %p235, %s21, 1
        %s237 = smul.addr %s236, 2
        %s238 = smul.addr %s237, 8
        %s239 = scalar_lea.vmem %s0, %s238
        %p240 = pneg %p42
        %p241 = pneg %p39
        %p242 = pneg %p63
        %p243 = pneg %p60
        %p244 = pneg %p84
        %p245 = pneg %p81
        %p246 = pneg %p105
        %p247 = pneg %p102
        %p248 = pneg %p126
        %p249 = pneg %p123
        %p250 = pneg %p147
        %p251 = pneg %p144
        %p252 = pneg %p173
        %p253 = pneg %p170
        %s254 = sand.u32 %s160, 1
        %s255 = scalar_lea.sflag [#allocation6], %s254
        %s256 = sand.u32 %s160, 1
        %s257 = smul.addr %s256, 32
        %s258 = scalar_lea.vmem [#allocation8], %s257
        %p259 = scmp.lt.s32.totalorder %s21, 1
        %s260 = scalar_select %p259, %s21, 1
        %s261 = smul.addr %s260, 2
        %s262 = smul.addr %s261, 8
        %s263 = scalar_lea.vmem %s0, %s262
        %s264 = sld [smem:[#allocation5]]
        %s265 = sld [smem:[#allocation5 + $0x1]]
        %v266 = vld [vmem:[%s263] sm:$0xff]
        %v267 = vld [vmem:[%s263 + $0x8] sm:$0xff]
        %v268 = vld [vmem:[%s1] sm:$0xff]
        %vm269 = vcmask 64512
        %v271 = vsel %vm269, %v268, 0
        %273 = vmatprep.subr.mxu0 %v267
        %274 = vmatpush1.msra.mxu0 %v266
        %275 = vmatprep.subr.mxu0 0.0
        %276 = vmatpush1.msra.mxu0 0.0
        %277 = vmatprep.subr.mxu0 0.0
        %278 = vmatpush1.msra.mxu0 0.0
        %279 = vmatprep.subr.mxu0 0.0
        %280 = vmatpush1.msra.mxu0 0.0
        %281 = vmatprep.subr.mxu0 0.0
        %282 = vmatpush1.msra.mxu0 0.0
        %283 = vmatprep.subr.mxu0 0.0
        %284 = vmatpush1.msra.mxu0 0.0
        %285 = vmatprep.subr.mxu0 0.0
        %286 = vmatpush1.msra.mxu0 0.0
        %287 = vmatprep.subr.mxu0 0.0
        %288 = vmatpush1.msra.mxu0 0.0
        %289 = vmatprep.subr.mxu0 0.0
        %290 = vmatpush1.msra.mxu0 0.0
        %291 = vmatprep.subr.mxu0 0.0
        %292 = vmatpush1.msra.mxu0 0.0
        %293 = vmatprep.subr.mxu0 0.0
        %294 = vmatpush1.msra.mxu0 0.0
        %295 = vmatprep.subr.mxu0 0.0
        %296 = vmatpush1.msra.mxu0 0.0
        %297 = vmatprep.subr.mxu0 0.0
        %298 = vmatpush1.msra.mxu0 0.0
        %299 = vmatprep.subr.mxu0 0.0
        %300 = vmatpush1.msra.mxu0 0.0
        %301 = vmatprep.subr.mxu0 0.0
        %302 = vmatpush1.msra.mxu0 0.0
        %303 = vmatprep.subr.mxu0 0.0
        %304 = vmatpush1.msra.mxu0 0.0
        %305 = vmatprep.subr.mxu0 0.0
        %306 = vmatpush1.msra.mxu0 0.0
        %307 = vmatprep.subr.mxu0 0.0
        %308 = vmatpush1.msra.mxu0 0.0
        %309 = vmatprep.subr.mxu0 0.0
        %310 = vmatpush1.msra.mxu0 0.0
        %311 = vmatprep.subr.mxu0 0.0
        %312 = vmatpush1.msra.mxu0 0.0
        %313 = vmatprep.subr.mxu0 0.0
        %314 = vmatpush1.msra.mxu0 0.0
        %315 = vmatprep.subr.mxu0 0.0
        %316 = vmatpush1.msra.mxu0 0.0
        %317 = vmatprep.subr.mxu0 0.0
        %318 = vmatpush1.msra.mxu0 0.0
        %319 = vmatprep.subr.mxu0 0.0
        %320 = vmatpush1.msra.mxu0 0.0
        %321 = vmatprep.subr.mxu0 0.0
        %322 = vmatpush1.msra.mxu0 0.0
        %323 = vmatprep.subr.mxu0 0.0
        %324 = vmatpush1.msra.mxu0 0.0
        %325 = vmatprep.subr.mxu0 0.0
        %326 = vmatpush1.msra.mxu0 0.0
        %327 = vmatprep.subr.mxu0 0.0
        %328 = vmatpush1.msra.mxu0 0.0
        %329 = vmatprep.subr.mxu0 0.0
        %330 = vmatpush1.msra.mxu0 0.0
        %331 = vmatprep.subr.mxu0 0.0
        %332 = vmatpush1.msra.mxu0 0.0
        %333 = vmatprep.subr.mxu0 0.0
        %334 = vmatpush1.msra.mxu0 0.0
        %335 = vmatprep.subr.mxu0 0.0
        %336 = vmatpush1.msra.mxu0 0.0
        %337 = vmatprep.mubr.f32.mxu0 0.0
        %338 = vmatmul.mubr.f32.gmra.mrb[0].mxu0 %v271
        %v339 = vpop.f32.mrb[0].mxu0
        %v340 = vadd.f32 0.0, %v339
        %v341 = vpop.f32.mrb[0].mxu0
        %v342 = vadd.f32 0.0, %v341
        %343 = vdwg.mxu0
        %vm344 = vcmp.ge.f32.partialorder %v340, 0.0
        %vm345 = vcmp.ge.f32.partialorder %v342, 0.0
        %v346 = vstv %s264
        %v347 = vmul.f32 %v346, %v340
        %v348 = vmul.f32 %v346, %v342
        %v349 = vsel %vm344, %v340, %v347
        %v350 = vsel %vm345, %v342, %v348
        %351 = vst [vmem:[#allocation2] sm:$0xff] %v349
        %352 = vst [vmem:[#allocation2 + $0x8] sm:$0xff] %v350
        %vm353 = vcmask 138240
        %354 = vst.msk [vmem:[#allocation2 + $0x10] sm:$0xff] %vm353, 0.0
        %v355 = vlaneseq
        %v356 = vand.u32 %v355, 127
        %v357 = vadd.s32 %v356, 128
        %vm358 = vcmp.lt.s32.totalorder %v356, 0
        %v359 = vsub.s32 0, %v356
        %v360 = vsel %vm358, %v359, %v356
        %v361 = vshrl.u32 %v360, 4
        %v362 = vand.u32 %v360, 15
        %v363 = vsub.s32 0, %v362
        %v364 = vsel %vm358, %v363, %v362
        %vm365 = vcmp.lt.s32.totalorder %v357, 0
        %v366 = vsub.s32 0, %v357
        %v367 = vsel %vm365, %v366, %v357
        %v368 = vshrl.u32 %v367, 4
        %v369 = vand.u32 %v367, 15
        %v370 = vsub.s32 0, %v369
        %v371 = vsel %vm365, %v370, %v369
        %vm372 = vcmp.ne.s32.totalorder %v364, 0
        %vm373 = vcmp.ne.s32.totalorder %v371, 0
        %vm374 = vcmp.lt.s32.totalorder %v364, 0
        %vm375 = vcmp.lt.s32.totalorder %v371, 0
        %vm376 = vmand %vm374, %vm372
        %vm377 = vmand %vm375, %vm373
        %v378 = vadd.s32 %v364, 16
        %v379 = vadd.s32 %v371, 16
        %v380 = vsel %vm376, %v378, %v364
        %v381 = vsel %vm377, %v379, %v371
        %vm382 = vcmp.ne.s32.totalorder %v380, 15
        %vm383 = vcmp.ne.s32.totalorder %v381, 15
        %v384 = vld [vmem:[#allocation2] sm:$0xff]
        %v385 = vld [vmem:[#allocation2 + $0x8] sm:$0xff]
        %v386 = vld [vmem:[#allocation2 + $0x10] sm:$0xff]
        %390 = vrot.lane.b32.xlu0 %v384, 127
        %v391 = vpop.permute.xlu0 %390
        %392 = vrot.lane.b32.xlu0 %v385, 127
        %v393 = vpop.permute.xlu0 %392
        %394 = vrot.lane.b32.xlu0 %v386, 127
        %v395 = vpop.permute.xlu0 %394
        %vm396 = vcmask 1039360
        %v397 = vsel %vm396, %v391, %v393
        %v398 = vsel %vm396, %v393, %v395
        %v401 = vsel %vm382, %v397, 0.0
        %v402 = vsel %vm383, %v398, 0.0
        %403 = vrot.lane.b32.xlu0 %v384, 111
        %v404 = vpop.permute.xlu0 %403
        %405 = vrot.lane.b32.xlu0 %v385, 111
        %v406 = vpop.permute.xlu0 %405
        %407 = vrot.lane.b32.xlu0 %v386, 111
        %v408 = vpop.permute.xlu0 %407
        %vm409 = vcmask 908288
        %v410 = vsel %vm409, %v404, %v406
        %v411 = vsel %vm409, %v406, %v408
        %v414 = vsel %vm382, %v410, 0.0
        %v415 = vsel %vm383, %v411, 0.0
        %v416 = vld [vmem:[%s4] sm:$0xf]
        %v418 = vsel %vm269, %v416, 0
        %420 = vmatprep.subr.mxu0 %v267
        %421 = vmatpush1.msra.mxu0 %v266
        %422 = vmatprep.subr.mxu0 0.0
        %423 = vmatpush1.msra.mxu0 0.0
        %424 = vmatprep.subr.mxu0 0.0
        %425 = vmatpush1.msra.mxu0 0.0
        %426 = vmatprep.subr.mxu0 0.0
        %427 = vmatpush1.msra.mxu0 0.0
        %428 = vmatprep.subr.mxu0 0.0
        %429 = vmatpush1.msra.mxu0 0.0
        %430 = vmatprep.subr.mxu0 0.0
        %431 = vmatpush1.msra.mxu0 0.0
        %432 = vmatprep.subr.mxu0 0.0
        %433 = vmatpush1.msra.mxu0 0.0
        %434 = vmatprep.subr.mxu0 0.0
        %435 = vmatpush1.msra.mxu0 0.0
        %436 = vmatprep.subr.mxu0 0.0
        %437 = vmatpush1.msra.mxu0 0.0
        %438 = vmatprep.subr.mxu0 0.0
        %439 = vmatpush1.msra.mxu0 0.0
        %440 = vmatprep.subr.mxu0 0.0
        %441 = vmatpush1.msra.mxu0 0.0
        %442 = vmatprep.subr.mxu0 0.0
        %443 = vmatpush1.msra.mxu0 0.0
        %444 = vmatprep.subr.mxu0 0.0
        %445 = vmatpush1.msra.mxu0 0.0
        %446 = vmatprep.subr.mxu0 0.0
        %447 = vmatpush1.msra.mxu0 0.0
        %448 = vmatprep.subr.mxu0 0.0
        %449 = vmatpush1.msra.mxu0 0.0
        %450 = vmatprep.subr.mxu0 0.0
        %451 = vmatpush1.msra.mxu0 0.0
        %452 = vmatprep.subr.mxu0 0.0
        %453 = vmatpush1.msra.mxu0 0.0
        %454 = vmatprep.subr.mxu0 0.0
        %455 = vmatpush1.msra.mxu0 0.0
        %456 = vmatprep.subr.mxu0 0.0
        %457 = vmatpush1.msra.mxu0 0.0
        %458 = vmatprep.subr.mxu0 0.0
        %459 = vmatpush1.msra.mxu0 0.0
        %460 = vmatprep.subr.mxu0 0.0
        %461 = vmatpush1.msra.mxu0 0.0
        %462 = vmatprep.subr.mxu0 0.0
        %463 = vmatpush1.msra.mxu0 0.0
        %464 = vmatprep.subr.mxu0 0.0
        %465 = vmatpush1.msra.mxu0 0.0
        %466 = vmatprep.subr.mxu0 0.0
        %467 = vmatpush1.msra.mxu0 0.0
        %468 = vmatprep.subr.mxu0 0.0
        %469 = vmatpush1.msra.mxu0 0.0
        %470 = vmatprep.subr.mxu0 0.0
        %471 = vmatpush1.msra.mxu0 0.0
        %472 = vmatprep.subr.mxu0 0.0
        %473 = vmatpush1.msra.mxu0 0.0
        %474 = vmatprep.subr.mxu0 0.0
        %475 = vmatpush1.msra.mxu0 0.0
        %476 = vmatprep.subr.mxu0 0.0
        %477 = vmatpush1.msra.mxu0 0.0
        %478 = vmatprep.subr.mxu0 0.0
        %479 = vmatpush1.msra.mxu0 0.0
        %480 = vmatprep.subr.mxu0 0.0
        %481 = vmatpush1.msra.mxu0 0.0
        %482 = vmatprep.subr.mxu0 0.0
        %483 = vmatpush1.msra.mxu0 0.0
        %484 = vmatprep.mubr.f32.mxu0 0.0
        %485 = vmatmul.mubr.f32.gmra.mrb[0].mxu0 %v418
        %v486 = vpop.f32.mrb[0].mxu0
        %v487 = vadd.f32 0.0, %v486
        %v488 = vpop.f32.mrb[0].mxu0
        %v489 = vadd.f32 0.0, %v488
        %490 = vdwg.mxu0
        %v493 = vcombine.low %v487, %v489
        %494 = vrot.lane.b32.xlu0 %v493, 16
        %v495 = vpop.permute.xlu0 %494
        %v496 = vrot.slane %v495, 4
        %vm497 = vcmask 130048
        %v498 = vsel %vm497, %v496, %v495
        %vm501 = vcmask 1043584
        %vm502 = vcmask 1047556
        %vm503 = vmor %vm502, %vm501
        %504 = vst.msk [vmem:[#allocation3] sm:$0xff] %vm503, %v498
        %vm505 = vcmask 125952
        %506 = vst.msk [vmem:[#allocation3 + $0x8] sm:$0xf] %vm505, %v496
        %507 = vst.msk [vmem:[#allocation3] sm:$0xf] %vm505, %v487
        %508 = vrot.lane.b32.xlu0 %v489, 32
        %v509 = vpop.permute.xlu0 %508
        %vm511 = vcmask 257152
        %512 = vst.msk [vmem:[#allocation3 + $0x8] sm:$0xf] %vm511, %v509
        %v513 = vld [vmem:[#allocation3] sm:$0xff]
        %v514 = vld [vmem:[#allocation3 + $0x8] sm:$0xf]
        %v515 = vmul.f32 %v487, 0.75
        %v516 = vmul.f32 %v489, 0.75
        %v517 = vmul.f32 %v513, 0.25
        %v519 = vcombine.high %v517, %v517
        %v521 = vadd.f32 %v515, %v517
        %v522 = vadd.f32 %v516, %v519
        %v523 = vmul.f32 %v514, 0.25
        %525 = vrot.lane.b32.xlu0 %v517, 96
        %v526 = vpop.permute.xlu0 %525
        %527 = vrot.lane.b32.xlu0 %v519, 96
        %v528 = vpop.permute.xlu0 %527
        %529 = vrot.lane.b32.xlu0 %v523, 96
        %v530 = vpop.permute.xlu0 %529
        %vm531 = vcmask 785408
        %v532 = vsel %vm531, %v526, %v528
        %v533 = vsel %vm531, %v528, %v530
        %v536 = vadd.f32 %v515, %v532
        %v537 = vadd.f32 %v516, %v533
        %vm538 = vcmask 3072
        %539 = vst.msk [vmem:[#allocation4] sm:$0xf] %vm538, 0.0
        %540 = vst.msk [vmem:[#allocation4 + $0xc] sm:$0xf] %vm538, 0.0
        %vm541 = vcmask 11272
        %542 = vst.msk [vmem:[#allocation4 + $0x8] sm:$0xf] %vm541, 0.0
        %543 = vst.msk [vmem:[#allocation4 + $0x14] sm:$0xf] %vm541, 0.0
        %v546 = vcombine.low %v521, %v522
        %547 = vrot.lane.b32.xlu0 %v546, 1
        %v548 = vpop.permute.xlu0 %547
        %v549 = vrot.slane %v548, 4
        %vm550 = vcmask 7168
        %v551 = vsel %vm550, %v549, %v548
        %vm554 = vcmask 1043464
        %vm555 = vmor %vm502, %vm554
        %556 = vst.msk [vmem:[#allocation4] sm:$0xff] %vm555, %v551
        %557 = vst.msk [vmem:[#allocation4 + $0x8] sm:$0xf] %vm538, %v549
        %v560 = vcombine.low %v536, %v537
        %561 = vrot.lane.b32.xlu0 %v560, 1
        %v562 = vpop.permute.xlu0 %561
        %v563 = vrot.slane %v562, 4
        %v564 = vsel %vm550, %v563, %v562
        %s567 = scalar_lea.vmem [#allocation4], 12
        %568 = vst.msk [vmem:[%s567] sm:$0xff] %vm555, %v564
        %569 = vst.msk [vmem:[%s567 + $0x8] sm:$0xf] %vm538, %v563
        %vm570 = vcmp.eq.s32.totalorder %v380, 0
        %vm571 = vcmp.eq.s32.totalorder %v381, 0
        %vm572 = vcmp.eq.s32.totalorder %v380, 15
        %vm573 = vcmp.eq.s32.totalorder %v381, 15
        %v574 = vld [vmem:[#allocation4] sm:$0xff]
        %v576 = vcombine.high %v574, %v574
        %v578 = vsel %vm570, %v521, %v574
        %v579 = vsel %vm571, %v522, %v576
        %v580 = vld [vmem:[#allocation4 + $0x8] sm:$0xf]
        %582 = vrot.lane.b32.xlu0 %v574, 126
        %v583 = vpop.permute.xlu0 %582
        %584 = vrot.lane.b32.xlu0 %v576, 126
        %v585 = vpop.permute.xlu0 %584
        %586 = vrot.lane.b32.xlu0 %v580, 126
        %v587 = vpop.permute.xlu0 %586
        %vm588 = vcmask 1031168
        %v589 = vsel %vm588, %v583, %v585
        %v590 = vsel %vm588, %v585, %v587
        %v593 = vsel %vm572, %v521, %v589
        %v594 = vsel %vm573, %v522, %v590
        %v595 = vmul.f32 %v521, 0.75
        %v596 = vmul.f32 %v522, 0.75
        %v597 = vmul.f32 %v578, 0.25
        %v598 = vmul.f32 %v579, 0.25
        %v599 = vadd.f32 %v595, %v597
        %v600 = vadd.f32 %v596, %v598
        %v601 = vmul.f32 %v593, 0.25
        %v602 = vmul.f32 %v594, 0.25
        %v603 = vadd.f32 %v595, %v601
        %v604 = vadd.f32 %v596, %v602
        %v605 = vld [vmem:[%s567] sm:$0xff]
        %v607 = vcombine.high %v605, %v605
        %v609 = vsel %vm570, %v536, %v605
        %v610 = vsel %vm571, %v537, %v607
        %v611 = vld [vmem:[%s567 + $0x8] sm:$0xf]
        %613 = vrot.lane.b32.xlu0 %v605, 126
        %v614 = vpop.permute.xlu0 %613
        %615 = vrot.lane.b32.xlu0 %v607, 126
        %v616 = vpop.permute.xlu0 %615
        %617 = vrot.lane.b32.xlu0 %v611, 126
        %v618 = vpop.permute.xlu0 %617
        %v619 = vsel %vm588, %v614, %v616
        %v620 = vsel %vm588, %v616, %v618
        %v623 = vsel %vm572, %v536, %v619
        %v624 = vsel %vm573, %v537, %v620
        %v625 = vmul.f32 %v536, 0.75
        %v626 = vmul.f32 %v537, 0.75
        %v627 = vmul.f32 %v609, 0.25
        %v628 = vmul.f32 %v610, 0.25
        %v629 = vadd.f32 %v625, %v627
        %v630 = vadd.f32 %v626, %v628
        %v631 = vmul.f32 %v623, 0.25
        %v632 = vmul.f32 %v624, 0.25
        %v633 = vadd.f32 %v625, %v631
        %v634 = vadd.f32 %v626, %v632
        %v635 = vld [vmem:[%s3] sm:$0xf]
        %s636 = scalar_lea.vmem %s2, 32
        %v637 = vld [vmem:[%s636] sm:$0xff]
        %v639 = vsel %vm269, %v637, 0
        %641 = vmatprep.subr.mxu0 %v350
        %642 = vmatpush1.msra.mxu0 %v349
        %643 = vmatprep.subr.mxu0 0.0
        %644 = vmatpush1.msra.mxu0 0.0
        %645 = vmatprep.subr.mxu0 0.0
        %646 = vmatpush1.msra.mxu0 0.0
        %647 = vmatprep.subr.mxu0 0.0
        %648 = vmatpush1.msra.mxu0 0.0
        %649 = vmatprep.subr.mxu0 0.0
        %650 = vmatpush1.msra.mxu0 0.0
        %651 = vmatprep.subr.mxu0 0.0
        %652 = vmatpush1.msra.mxu0 0.0
        %653 = vmatprep.subr.mxu0 0.0
        %654 = vmatpush1.msra.mxu0 0.0
        %655 = vmatprep.subr.mxu0 0.0
        %656 = vmatpush1.msra.mxu0 0.0
        %657 = vmatprep.subr.mxu0 0.0
        %658 = vmatpush1.msra.mxu0 0.0
        %659 = vmatprep.subr.mxu0 0.0
        %660 = vmatpush1.msra.mxu0 0.0
        %661 = vmatprep.subr.mxu0 0.0
        %662 = vmatpush1.msra.mxu0 0.0
        %663 = vmatprep.subr.mxu0 0.0
        %664 = vmatpush1.msra.mxu0 0.0
        %665 = vmatprep.subr.mxu0 0.0
        %666 = vmatpush1.msra.mxu0 0.0
        %667 = vmatprep.subr.mxu0 0.0
        %668 = vmatpush1.msra.mxu0 0.0
        %669 = vmatprep.subr.mxu0 0.0
        %670 = vmatpush1.msra.mxu0 0.0
        %671 = vmatprep.subr.mxu0 0.0
        %672 = vmatpush1.msra.mxu0 0.0
        %673 = vmatprep.subr.mxu0 0.0
        %674 = vmatpush1.msra.mxu0 0.0
        %675 = vmatprep.subr.mxu0 0.0
        %676 = vmatpush1.msra.mxu0 0.0
        %677 = vmatprep.subr.mxu0 0.0
        %678 = vmatpush1.msra.mxu0 0.0
        %679 = vmatprep.subr.mxu0 0.0
        %680 = vmatpush1.msra.mxu0 0.0
        %681 = vmatprep.subr.mxu0 0.0
        %682 = vmatpush1.msra.mxu0 0.0
        %683 = vmatprep.subr.mxu0 0.0
        %684 = vmatpush1.msra.mxu0 0.0
        %685 = vmatprep.subr.mxu0 0.0
        %686 = vmatpush1.msra.mxu0 0.0
        %687 = vmatprep.subr.mxu0 0.0
        %688 = vmatpush1.msra.mxu0 0.0
        %689 = vmatprep.subr.mxu0 0.0
        %690 = vmatpush1.msra.mxu0 0.0
        %691 = vmatprep.subr.mxu0 0.0
        %692 = vmatpush1.msra.mxu0 0.0
        %693 = vmatprep.subr.mxu0 0.0
        %694 = vmatpush1.msra.mxu0 0.0
        %695 = vmatprep.subr.mxu0 0.0
        %696 = vmatpush1.msra.mxu0 0.0
        %697 = vmatprep.subr.mxu0 0.0
        %698 = vmatpush1.msra.mxu0 0.0
        %699 = vmatprep.subr.mxu0 0.0
        %700 = vmatpush1.msra.mxu0 0.0
        %701 = vmatprep.subr.mxu0 0.0
        %702 = vmatpush1.msra.mxu0 0.0
        %703 = vmatprep.subr.mxu0 0.0
        %704 = vmatpush1.msra.mxu0 0.0
        %705 = vmatprep.mubr.f32.mxu0 0.0
        %706 = vmatmul.mubr.f32.gmra.mrb[0].mxu0 %v639
        %v707 = vpop.f32.mrb[0].mxu0
        %v708 = vadd.f32 0.0, %v707
        %v709 = vpop.f32.mrb[0].mxu0
        %v710 = vadd.f32 0.0, %v709
        %711 = vdwg.mxu0
        %vm712 = vcmp.ge.f32.partialorder %v708, 0.0
        %vm713 = vcmp.ge.f32.partialorder %v710, 0.0
        %v714 = vstv %s265
        %v715 = vmul.f32 %v714, %v708
        %v716 = vmul.f32 %v714, %v710
        %v717 = vsel %vm712, %v708, %v715
        %v718 = vsel %vm713, %v710, %v716
        %v720 = vsel %vm269, %v635, 0
        %722 = vmatprep.subr.mxu0 %v718
        %723 = vmatpush1.msra.mxu0 %v717
        %724 = vmatprep.subr.mxu0 0.0
        %725 = vmatpush1.msra.mxu0 0.0
        %726 = vmatprep.subr.mxu0 0.0
        %727 = vmatpush1.msra.mxu0 0.0
        %728 = vmatprep.subr.mxu0 0.0
        %729 = vmatpush1.msra.mxu0 0.0
        %730 = vmatprep.subr.mxu0 0.0
        %731 = vmatpush1.msra.mxu0 0.0
        %732 = vmatprep.subr.mxu0 0.0
        %733 = vmatpush1.msra.mxu0 0.0
        %734 = vmatprep.subr.mxu0 0.0
        %735 = vmatpush1.msra.mxu0 0.0
        %736 = vmatprep.subr.mxu0 0.0
        %737 = vmatpush1.msra.mxu0 0.0
        %738 = vmatprep.subr.mxu0 0.0
        %739 = vmatpush1.msra.mxu0 0.0
        %740 = vmatprep.subr.mxu0 0.0
        %741 = vmatpush1.msra.mxu0 0.0
        %742 = vmatprep.subr.mxu0 0.0
        %743 = vmatpush1.msra.mxu0 0.0
        %744 = vmatprep.subr.mxu0 0.0
        %745 = vmatpush1.msra.mxu0 0.0
        %746 = vmatprep.subr.mxu0 0.0
        %747 = vmatpush1.msra.mxu0 0.0
        %748 = vmatprep.subr.mxu0 0.0
        %749 = vmatpush1.msra.mxu0 0.0
        %750 = vmatprep.subr.mxu0 0.0
        %751 = vmatpush1.msra.mxu0 0.0
        %752 = vmatprep.subr.mxu0 0.0
        %753 = vmatpush1.msra.mxu0 0.0
        %754 = vmatprep.subr.mxu0 0.0
        %755 = vmatpush1.msra.mxu0 0.0
        %756 = vmatprep.subr.mxu0 0.0
        %757 = vmatpush1.msra.mxu0 0.0
        %758 = vmatprep.subr.mxu0 0.0
        %759 = vmatpush1.msra.mxu0 0.0
        %760 = vmatprep.subr.mxu0 0.0
        %761 = vmatpush1.msra.mxu0 0.0
        %762 = vmatprep.subr.mxu0 0.0
        %763 = vmatpush1.msra.mxu0 0.0
        %764 = vmatprep.subr.mxu0 0.0
        %765 = vmatpush1.msra.mxu0 0.0
        %766 = vmatprep.subr.mxu0 0.0
        %767 = vmatpush1.msra.mxu0 0.0
        %768 = vmatprep.subr.mxu0 0.0
        %769 = vmatpush1.msra.mxu0 0.0
        %770 = vmatprep.subr.mxu0 0.0
        %771 = vmatpush1.msra.mxu0 0.0
        %772 = vmatprep.subr.mxu0 0.0
        %773 = vmatpush1.msra.mxu0 0.0
        %774 = vmatprep.subr.mxu0 0.0
        %775 = vmatpush1.msra.mxu0 0.0
        %776 = vmatprep.subr.mxu0 0.0
        %777 = vmatpush1.msra.mxu0 0.0
        %778 = vmatprep.subr.mxu0 0.0
        %779 = vmatpush1.msra.mxu0 0.0
        %780 = vmatprep.subr.mxu0 0.0
        %781 = vmatpush1.msra.mxu0 0.0
        %782 = vmatprep.subr.mxu0 0.0
        %783 = vmatpush1.msra.mxu0 0.0
        %784 = vmatprep.subr.mxu0 0.0
        %785 = vmatpush1.msra.mxu0 0.0
        %786 = vmatprep.mubr.f32.mxu0 0.0
        %787 = vmatmul.mubr.f32.gmra.mrb[0].mxu0 %v720
        %v788 = vpop.f32.mrb[0].mxu0
        %v789 = vadd.f32 %v599, %v788
        %v790 = vpop.f32.mrb[0].mxu0
        %v791 = vadd.f32 %v600, %v790
        %792 = vdwg.mxu0
        %v795 = vcombine.low %v789, %v791
        %797 = vst [vmem:[%s258] sm:$0xff] %v795
        %s798 = scalar_lea.vmem %s2, 40
        %v799 = vld [vmem:[%s798] sm:$0xff]
        %s800 = scalar_lea.vmem %s2, 24
        %v801 = vld [vmem:[%s800] sm:$0xff]
        %v803 = vsel %vm269, %v801, 0
        %805 = vmatprep.subr.mxu0 %v402
        %806 = vmatpush1.msra.mxu0 %v401
        %807 = vmatprep.subr.mxu0 0.0
        %808 = vmatpush1.msra.mxu0 0.0
        %809 = vmatprep.subr.mxu0 0.0
        %810 = vmatpush1.msra.mxu0 0.0
        %811 = vmatprep.subr.mxu0 0.0
        %812 = vmatpush1.msra.mxu0 0.0
        %813 = vmatprep.subr.mxu0 0.0
        %814 = vmatpush1.msra.mxu0 0.0
        %815 = vmatprep.subr.mxu0 0.0
        %816 = vmatpush1.msra.mxu0 0.0
        %817 = vmatprep.subr.mxu0 0.0
        %818 = vmatpush1.msra.mxu0 0.0
        %819 = vmatprep.subr.mxu0 0.0
        %820 = vmatpush1.msra.mxu0 0.0
        %821 = vmatprep.subr.mxu0 0.0
        %822 = vmatpush1.msra.mxu0 0.0
        %823 = vmatprep.subr.mxu0 0.0
        %824 = vmatpush1.msra.mxu0 0.0
        %825 = vmatprep.subr.mxu0 0.0
        %826 = vmatpush1.msra.mxu0 0.0
        %827 = vmatprep.subr.mxu0 0.0
        %828 = vmatpush1.msra.mxu0 0.0
        %829 = vmatprep.subr.mxu0 0.0
        %830 = vmatpush1.msra.mxu0 0.0
        %831 = vmatprep.subr.mxu0 0.0
        %832 = vmatpush1.msra.mxu0 0.0
        %833 = vmatprep.subr.mxu0 0.0
        %834 = vmatpush1.msra.mxu0 0.0
        %835 = vmatprep.subr.mxu0 0.0
        %836 = vmatpush1.msra.mxu0 0.0
        %837 = vmatprep.subr.mxu0 0.0
        %838 = vmatpush1.msra.mxu0 0.0
        %839 = vmatprep.subr.mxu0 0.0
        %840 = vmatpush1.msra.mxu0 0.0
        %841 = vmatprep.subr.mxu0 0.0
        %842 = vmatpush1.msra.mxu0 0.0
        %843 = vmatprep.subr.mxu0 0.0
        %844 = vmatpush1.msra.mxu0 0.0
        %845 = vmatprep.subr.mxu0 0.0
        %846 = vmatpush1.msra.mxu0 0.0
        %847 = vmatprep.subr.mxu0 0.0
        %848 = vmatpush1.msra.mxu0 0.0
        %849 = vmatprep.subr.mxu0 0.0
        %850 = vmatpush1.msra.mxu0 0.0
        %851 = vmatprep.subr.mxu0 0.0
        %852 = vmatpush1.msra.mxu0 0.0
        %853 = vmatprep.subr.mxu0 0.0
        %854 = vmatpush1.msra.mxu0 0.0
        %855 = vmatprep.subr.mxu0 0.0
        %856 = vmatpush1.msra.mxu0 0.0
        %857 = vmatprep.subr.mxu0 0.0
        %858 = vmatpush1.msra.mxu0 0.0
        %859 = vmatprep.subr.mxu0 0.0
        %860 = vmatpush1.msra.mxu0 0.0
        %861 = vmatprep.subr.mxu0 0.0
        %862 = vmatpush1.msra.mxu0 0.0
        %863 = vmatprep.subr.mxu0 0.0
        %864 = vmatpush1.msra.mxu0 0.0
        %865 = vmatprep.subr.mxu0 0.0
        %866 = vmatpush1.msra.mxu0 0.0
        %867 = vmatprep.subr.mxu0 0.0
        %868 = vmatpush1.msra.mxu0 0.0
        %869 = vmatprep.mubr.f32.mxu0 0.0
        %870 = vmatmul.mubr.f32.gmra.mrb[0].mxu0 %v803
        %v871 = vpop.f32.mrb[0].mxu0
        %v872 = vadd.f32 0.0, %v871
        %v873 = vpop.f32.mrb[0].mxu0
        %v874 = vadd.f32 0.0, %v873
        %875 = vdwg.mxu0
        %v877 = vsel %vm269, %v799, 0
        %879 = vmatprep.subr.mxu0 %v350
        %880 = vmatpush1.msra.mxu0 %v349
        %881 = vmatprep.subr.mxu0 0.0
        %882 = vmatpush1.msra.mxu0 0.0
        %883 = vmatprep.subr.mxu0 0.0
        %884 = vmatpush1.msra.mxu0 0.0
        %885 = vmatprep.subr.mxu0 0.0
        %886 = vmatpush1.msra.mxu0 0.0
        %887 = vmatprep.subr.mxu0 0.0
        %888 = vmatpush1.msra.mxu0 0.0
        %889 = vmatprep.subr.mxu0 0.0
        %890 = vmatpush1.msra.mxu0 0.0
        %891 = vmatprep.subr.mxu0 0.0
        %892 = vmatpush1.msra.mxu0 0.0
        %893 = vmatprep.subr.mxu0 0.0
        %894 = vmatpush1.msra.mxu0 0.0
        %895 = vmatprep.subr.mxu0 0.0
        %896 = vmatpush1.msra.mxu0 0.0
        %897 = vmatprep.subr.mxu0 0.0
        %898 = vmatpush1.msra.mxu0 0.0
        %899 = vmatprep.subr.mxu0 0.0
        %900 = vmatpush1.msra.mxu0 0.0
        %901 = vmatprep.subr.mxu0 0.0
        %902 = vmatpush1.msra.mxu0 0.0
        %903 = vmatprep.subr.mxu0 0.0
        %904 = vmatpush1.msra.mxu0 0.0
        %905 = vmatprep.subr.mxu0 0.0
        %906 = vmatpush1.msra.mxu0 0.0
        %907 = vmatprep.subr.mxu0 0.0
        %908 = vmatpush1.msra.mxu0 0.0
        %909 = vmatprep.subr.mxu0 0.0
        %910 = vmatpush1.msra.mxu0 0.0
        %911 = vmatprep.subr.mxu0 0.0
        %912 = vmatpush1.msra.mxu0 0.0
        %913 = vmatprep.subr.mxu0 0.0
        %914 = vmatpush1.msra.mxu0 0.0
        %915 = vmatprep.subr.mxu0 0.0
        %916 = vmatpush1.msra.mxu0 0.0
        %917 = vmatprep.subr.mxu0 0.0
        %918 = vmatpush1.msra.mxu0 0.0
        %919 = vmatprep.subr.mxu0 0.0
        %920 = vmatpush1.msra.mxu0 0.0
        %921 = vmatprep.subr.mxu0 0.0
        %922 = vmatpush1.msra.mxu0 0.0
        %923 = vmatprep.subr.mxu0 0.0
        %924 = vmatpush1.msra.mxu0 0.0
        %925 = vmatprep.subr.mxu0 0.0
        %926 = vmatpush1.msra.mxu0 0.0
        %927 = vmatprep.subr.mxu0 0.0
        %928 = vmatpush1.msra.mxu0 0.0
        %929 = vmatprep.subr.mxu0 0.0
        %930 = vmatpush1.msra.mxu0 0.0
        %931 = vmatprep.subr.mxu0 0.0
        %932 = vmatpush1.msra.mxu0 0.0
        %933 = vmatprep.subr.mxu0 0.0
        %934 = vmatpush1.msra.mxu0 0.0
        %935 = vmatprep.subr.mxu0 0.0
        %936 = vmatpush1.msra.mxu0 0.0
        %937 = vmatprep.subr.mxu0 0.0
        %938 = vmatpush1.msra.mxu0 0.0
        %939 = vmatprep.subr.mxu0 0.0
        %940 = vmatpush1.msra.mxu0 0.0
        %941 = vmatprep.subr.mxu0 0.0
        %942 = vmatpush1.msra.mxu0 0.0
        %943 = vmatprep.mubr.f32.mxu0 0.0
        %944 = vmatmul.mubr.f32.gmra.mrb[0].mxu0 %v877
        %v945 = vpop.f32.mrb[0].mxu0
        %v946 = vadd.f32 %v872, %v945
        %v947 = vpop.f32.mrb[0].mxu0
        %v948 = vadd.f32 %v874, %v947
        %949 = vdwg.mxu0
        %vm950 = vcmp.ge.f32.partialorder %v946, 0.0
        %vm951 = vcmp.ge.f32.partialorder %v948, 0.0
        %v952 = vmul.f32 %v714, %v946
        %v953 = vmul.f32 %v714, %v948
        %v954 = vsel %vm950, %v946, %v952
        %v955 = vsel %vm951, %v948, %v953
        %956 = vmatprep.subr.mxu0 %v955
        %957 = vmatpush1.msra.mxu0 %v954
        %958 = vmatprep.subr.mxu0 0.0
        %959 = vmatpush1.msra.mxu0 0.0
        %960 = vmatprep.subr.mxu0 0.0
        %961 = vmatpush1.msra.mxu0 0.0
        %962 = vmatprep.subr.mxu0 0.0
        %963 = vmatpush1.msra.mxu0 0.0
        %964 = vmatprep.subr.mxu0 0.0
        %965 = vmatpush1.msra.mxu0 0.0
        %966 = vmatprep.subr.mxu0 0.0
        %967 = vmatpush1.msra.mxu0 0.0
        %968 = vmatprep.subr.mxu0 0.0
        %969 = vmatpush1.msra.mxu0 0.0
        %970 = vmatprep.subr.mxu0 0.0
        %971 = vmatpush1.msra.mxu0 0.0
        %972 = vmatprep.subr.mxu0 0.0
        %973 = vmatpush1.msra.mxu0 0.0
        %974 = vmatprep.subr.mxu0 0.0
        %975 = vmatpush1.msra.mxu0 0.0
        %976 = vmatprep.subr.mxu0 0.0
        %977 = vmatpush1.msra.mxu0 0.0
        %978 = vmatprep.subr.mxu0 0.0
        %979 = vmatpush1.msra.mxu0 0.0
        %980 = vmatprep.subr.mxu0 0.0
        %981 = vmatpush1.msra.mxu0 0.0
        %982 = vmatprep.subr.mxu0 0.0
        %983 = vmatpush1.msra.mxu0 0.0
        %984 = vmatprep.subr.mxu0 0.0
        %985 = vmatpush1.msra.mxu0 0.0
        %986 = vmatprep.subr.mxu0 0.0
        %987 = vmatpush1.msra.mxu0 0.0
        %988 = vmatprep.subr.mxu0 0.0
        %989 = vmatpush1.msra.mxu0 0.0
        %990 = vmatprep.subr.mxu0 0.0
        %991 = vmatpush1.msra.mxu0 0.0
        %992 = vmatprep.subr.mxu0 0.0
        %993 = vmatpush1.msra.mxu0 0.0
        %994 = vmatprep.subr.mxu0 0.0
        %995 = vmatpush1.msra.mxu0 0.0
        %996 = vmatprep.subr.mxu0 0.0
        %997 = vmatpush1.msra.mxu0 0.0
        %998 = vmatprep.subr.mxu0 0.0
        %999 = vmatpush1.msra.mxu0 0.0
        %1000 = vmatprep.subr.mxu0 0.0
        %1001 = vmatpush1.msra.mxu0 0.0
        %1002 = vmatprep.subr.mxu0 0.0
        %1003 = vmatpush1.msra.mxu0 0.0
        %1004 = vmatprep.subr.mxu0 0.0
        %1005 = vmatpush1.msra.mxu0 0.0
        %1006 = vmatprep.subr.mxu0 0.0
        %1007 = vmatpush1.msra.mxu0 0.0
        %1008 = vmatprep.subr.mxu0 0.0
        %1009 = vmatpush1.msra.mxu0 0.0
        %1010 = vmatprep.subr.mxu0 0.0
        %1011 = vmatpush1.msra.mxu0 0.0
        %1012 = vmatprep.subr.mxu0 0.0
        %1013 = vmatpush1.msra.mxu0 0.0
        %1014 = vmatprep.subr.mxu0 0.0
        %1015 = vmatpush1.msra.mxu0 0.0
        %1016 = vmatprep.subr.mxu0 0.0
        %1017 = vmatpush1.msra.mxu0 0.0
        %1018 = vmatprep.subr.mxu0 0.0
        %1019 = vmatpush1.msra.mxu0 0.0
        %1020 = vmatprep.mubr.f32.mxu0 0.0
        %1021 = vmatmul.mubr.f32.gmra.mrb[0].mxu0 %v720
        %v1022 = vpop.f32.mrb[0].mxu0
        %v1023 = vadd.f32 %v603, %v1022
        %v1024 = vpop.f32.mrb[0].mxu0
        %v1025 = vadd.f32 %v604, %v1024
        %1026 = vdwg.mxu0
        %v1029 = vcombine.low %v1023, %v1025
        %s1031 = scalar_lea.vmem %s258, 8 [#allocation8]
        %1032 = vst [vmem:[%s1031] sm:$0xff] %v1029
        %s1033 = scalar_lea.vmem %s2, 56
        %v1034 = vld [vmem:[%s1033] sm:$0xff]
        %s1035 = scalar_lea.vmem %s2, 8
        %v1036 = vld [vmem:[%s1035] sm:$0xff]
        %1037 = vrot.lane.b32.xlu0 %v384, 112
        %v1038 = vpop.permute.xlu0 %1037
        %1039 = vrot.lane.b32.xlu0 %v385, 112
        %v1040 = vpop.permute.xlu0 %1039
        %1041 = vrot.lane.b32.xlu0 %v386, 112
        %v1042 = vpop.permute.xlu0 %1041
        %vm1043 = vcmask 916480
        %v1044 = vsel %vm1043, %v1038, %v1040
        %v1045 = vsel %vm1043, %v1040, %v1042
        %v1049 = vsel %vm269, %v1036, 0
        %1051 = vmatprep.subr.mxu0 %v1045
        %1052 = vmatpush1.msra.mxu0 %v1044
        %1053 = vmatprep.subr.mxu0 0.0
        %1054 = vmatpush1.msra.mxu0 0.0
        %1055 = vmatprep.subr.mxu0 0.0
        %1056 = vmatpush1.msra.mxu0 0.0
        %1057 = vmatprep.subr.mxu0 0.0
        %1058 = vmatpush1.msra.mxu0 0.0
        %1059 = vmatprep.subr.mxu0 0.0
        %1060 = vmatpush1.msra.mxu0 0.0
        %1061 = vmatprep.subr.mxu0 0.0
        %1062 = vmatpush1.msra.mxu0 0.0
        %1063 = vmatprep.subr.mxu0 0.0
        %1064 = vmatpush1.msra.mxu0 0.0
        %1065 = vmatprep.subr.mxu0 0.0
        %1066 = vmatpush1.msra.mxu0 0.0
        %1067 = vmatprep.subr.mxu0 0.0
        %1068 = vmatpush1.msra.mxu0 0.0
        %1069 = vmatprep.subr.mxu0 0.0
        %1070 = vmatpush1.msra.mxu0 0.0
        %1071 = vmatprep.subr.mxu0 0.0
        %1072 = vmatpush1.msra.mxu0 0.0
        %1073 = vmatprep.subr.mxu0 0.0
        %1074 = vmatpush1.msra.mxu0 0.0
        %1075 = vmatprep.subr.mxu0 0.0
        %1076 = vmatpush1.msra.mxu0 0.0
        %1077 = vmatprep.subr.mxu0 0.0
        %1078 = vmatpush1.msra.mxu0 0.0
        %1079 = vmatprep.subr.mxu0 0.0
        %1080 = vmatpush1.msra.mxu0 0.0
        %1081 = vmatprep.subr.mxu0 0.0
        %1082 = vmatpush1.msra.mxu0 0.0
        %1083 = vmatprep.subr.mxu0 0.0
        %1084 = vmatpush1.msra.mxu0 0.0
        %1085 = vmatprep.subr.mxu0 0.0
        %1086 = vmatpush1.msra.mxu0 0.0
        %1087 = vmatprep.subr.mxu0 0.0
        %1088 = vmatpush1.msra.mxu0 0.0
        %1089 = vmatprep.subr.mxu0 0.0
        %1090 = vmatpush1.msra.mxu0 0.0
        %1091 = vmatprep.subr.mxu0 0.0
        %1092 = vmatpush1.msra.mxu0 0.0
        %1093 = vmatprep.subr.mxu0 0.0
        %1094 = vmatpush1.msra.mxu0 0.0
        %1095 = vmatprep.subr.mxu0 0.0
        %1096 = vmatpush1.msra.mxu0 0.0
        %1097 = vmatprep.subr.mxu0 0.0
        %1098 = vmatpush1.msra.mxu0 0.0
        %1099 = vmatprep.subr.mxu0 0.0
        %1100 = vmatpush1.msra.mxu0 0.0
        %1101 = vmatprep.subr.mxu0 0.0
        %1102 = vmatpush1.msra.mxu0 0.0
        %1103 = vmatprep.subr.mxu0 0.0
        %1104 = vmatpush1.msra.mxu0 0.0
        %1105 = vmatprep.subr.mxu0 0.0
        %1106 = vmatpush1.msra.mxu0 0.0
        %1107 = vmatprep.subr.mxu0 0.0
        %1108 = vmatpush1.msra.mxu0 0.0
        %1109 = vmatprep.subr.mxu0 0.0
        %1110 = vmatpush1.msra.mxu0 0.0
        %1111 = vmatprep.subr.mxu0 0.0
        %1112 = vmatpush1.msra.mxu0 0.0
        %1113 = vmatprep.subr.mxu0 0.0
        %1114 = vmatpush1.msra.mxu0 0.0
        %1115 = vmatprep.mubr.f32.mxu0 0.0
        %1116 = vmatmul.mubr.f32.gmra.mrb[0].mxu0 %v1049
        %v1117 = vpop.f32.mrb[0].mxu0
        %v1118 = vadd.f32 0.0, %v1117
        %v1119 = vpop.f32.mrb[0].mxu0
        %v1120 = vadd.f32 0.0, %v1119
        %1121 = vdwg.mxu0
        %v1123 = vsel %vm269, %v1034, 0
        %1125 = vmatprep.subr.mxu0 %v350
        %1126 = vmatpush1.msra.mxu0 %v349
        %1127 = vmatprep.subr.mxu0 0.0
        %1128 = vmatpush1.msra.mxu0 0.0
        %1129 = vmatprep.subr.mxu0 0.0
        %1130 = vmatpush1.msra.mxu0 0.0
        %1131 = vmatprep.subr.mxu0 0.0
        %1132 = vmatpush1.msra.mxu0 0.0
        %1133 = vmatprep.subr.mxu0 0.0
        %1134 = vmatpush1.msra.mxu0 0.0
        %1135 = vmatprep.subr.mxu0 0.0
        %1136 = vmatpush1.msra.mxu0 0.0
        %1137 = vmatprep.subr.mxu0 0.0
        %1138 = vmatpush1.msra.mxu0 0.0
        %1139 = vmatprep.subr.mxu0 0.0
        %1140 = vmatpush1.msra.mxu0 0.0
        %1141 = vmatprep.subr.mxu0 0.0
        %1142 = vmatpush1.msra.mxu0 0.0
        %1143 = vmatprep.subr.mxu0 0.0
        %1144 = vmatpush1.msra.mxu0 0.0
        %1145 = vmatprep.subr.mxu0 0.0
        %1146 = vmatpush1.msra.mxu0 0.0
        %1147 = vmatprep.subr.mxu0 0.0
        %1148 = vmatpush1.msra.mxu0 0.0
        %1149 = vmatprep.subr.mxu0 0.0
        %1150 = vmatpush1.msra.mxu0 0.0
        %1151 = vmatprep.subr.mxu0 0.0
        %1152 = vmatpush1.msra.mxu0 0.0
        %1153 = vmatprep.subr.mxu0 0.0
        %1154 = vmatpush1.msra.mxu0 0.0
        %1155 = vmatprep.subr.mxu0 0.0
        %1156 = vmatpush1.msra.mxu0 0.0
        %1157 = vmatprep.subr.mxu0 0.0
        %1158 = vmatpush1.msra.mxu0 0.0
        %1159 = vmatprep.subr.mxu0 0.0
        %1160 = vmatpush1.msra.mxu0 0.0
        %1161 = vmatprep.subr.mxu0 0.0
        %1162 = vmatpush1.msra.mxu0 0.0
        %1163 = vmatprep.subr.mxu0 0.0
        %1164 = vmatpush1.msra.mxu0 0.0
        %1165 = vmatprep.subr.mxu0 0.0
        %1166 = vmatpush1.msra.mxu0 0.0
        %1167 = vmatprep.subr.mxu0 0.0
        %1168 = vmatpush1.msra.mxu0 0.0
        %1169 = vmatprep.subr.mxu0 0.0
        %1170 = vmatpush1.msra.mxu0 0.0
        %1171 = vmatprep.subr.mxu0 0.0
        %1172 = vmatpush1.msra.mxu0 0.0
        %1173 = vmatprep.subr.mxu0 0.0
        %1174 = vmatpush1.msra.mxu0 0.0
        %1175 = vmatprep.subr.mxu0 0.0
        %1176 = vmatpush1.msra.mxu0 0.0
        %1177 = vmatprep.subr.mxu0 0.0
        %1178 = vmatpush1.msra.mxu0 0.0
        %1179 = vmatprep.subr.mxu0 0.0
        %1180 = vmatpush1.msra.mxu0 0.0
        %1181 = vmatprep.subr.mxu0 0.0
        %1182 = vmatpush1.msra.mxu0 0.0
        %1183 = vmatprep.subr.mxu0 0.0
        %1184 = vmatpush1.msra.mxu0 0.0
        %1185 = vmatprep.subr.mxu0 0.0
        %1186 = vmatpush1.msra.mxu0 0.0
        %1187 = vmatprep.subr.mxu0 0.0
        %1188 = vmatpush1.msra.mxu0 0.0
        %1189 = vmatprep.mubr.f32.mxu0 0.0
        %1190 = vmatmul.mubr.f32.gmra.mrb[0].mxu0 %v1123
        %v1191 = vpop.f32.mrb[0].mxu0
        %v1192 = vadd.f32 %v1118, %v1191
        %v1193 = vpop.f32.mrb[0].mxu0
        %v1194 = vadd.f32 %v1120, %v1193
        %1195 = vdwg.mxu0
        %vm1196 = vcmp.ge.f32.partialorder %v1192, 0.0
        %vm1197 = vcmp.ge.f32.partialorder %v1194, 0.0
        %v1198 = vmul.f32 %v714, %v1192
        %v1199 = vmul.f32 %v714, %v1194
        %v1200 = vsel %vm1196, %v1192, %v1198
        %v1201 = vsel %vm1197, %v1194, %v1199
        %1202 = vmatprep.subr.mxu0 %v1201
        %1203 = vmatpush1.msra.mxu0 %v1200
        %1204 = vmatprep.subr.mxu0 0.0
        %1205 = vmatpush1.msra.mxu0 0.0
        %1206 = vmatprep.subr.mxu0 0.0
        %1207 = vmatpush1.msra.mxu0 0.0
        %1208 = vmatprep.subr.mxu0 0.0
        %1209 = vmatpush1.msra.mxu0 0.0
        %1210 = vmatprep.subr.mxu0 0.0
        %1211 = vmatpush1.msra.mxu0 0.0
        %1212 = vmatprep.subr.mxu0 0.0
        %1213 = vmatpush1.msra.mxu0 0.0
        %1214 = vmatprep.subr.mxu0 0.0
        %1215 = vmatpush1.msra.mxu0 0.0
        %1216 = vmatprep.subr.mxu0 0.0
        %1217 = vmatpush1.msra.mxu0 0.0
        %1218 = vmatprep.subr.mxu0 0.0
        %1219 = vmatpush1.msra.mxu0 0.0
        %1220 = vmatprep.subr.mxu0 0.0
        %1221 = vmatpush1.msra.mxu0 0.0
        %1222 = vmatprep.subr.mxu0 0.0
        %1223 = vmatpush1.msra.mxu0 0.0
        %1224 = vmatprep.subr.mxu0 0.0
        %1225 = vmatpush1.msra.mxu0 0.0
        %1226 = vmatprep.subr.mxu0 0.0
        %1227 = vmatpush1.msra.mxu0 0.0
        %1228 = vmatprep.subr.mxu0 0.0
        %1229 = vmatpush1.msra.mxu0 0.0
        %1230 = vmatprep.subr.mxu0 0.0
        %1231 = vmatpush1.msra.mxu0 0.0
        %1232 = vmatprep.subr.mxu0 0.0
        %1233 = vmatpush1.msra.mxu0 0.0
        %1234 = vmatprep.subr.mxu0 0.0
        %1235 = vmatpush1.msra.mxu0 0.0
        %1236 = vmatprep.subr.mxu0 0.0
        %1237 = vmatpush1.msra.mxu0 0.0
        %1238 = vmatprep.subr.mxu0 0.0
        %1239 = vmatpush1.msra.mxu0 0.0
        %1240 = vmatprep.subr.mxu0 0.0
        %1241 = vmatpush1.msra.mxu0 0.0
        %1242 = vmatprep.subr.mxu0 0.0
        %1243 = vmatpush1.msra.mxu0 0.0
        %1244 = vmatprep.subr.mxu0 0.0
        %1245 = vmatpush1.msra.mxu0 0.0
        %1246 = vmatprep.subr.mxu0 0.0
        %1247 = vmatpush1.msra.mxu0 0.0
        %1248 = vmatprep.subr.mxu0 0.0
        %1249 = vmatpush1.msra.mxu0 0.0
        %1250 = vmatprep.subr.mxu0 0.0
        %1251 = vmatpush1.msra.mxu0 0.0
        %1252 = vmatprep.subr.mxu0 0.0
        %1253 = vmatpush1.msra.mxu0 0.0
        %1254 = vmatprep.subr.mxu0 0.0
        %1255 = vmatpush1.msra.mxu0 0.0
        %1256 = vmatprep.subr.mxu0 0.0
        %1257 = vmatpush1.msra.mxu0 0.0
        %1258 = vmatprep.subr.mxu0 0.0
        %1259 = vmatpush1.msra.mxu0 0.0
        %1260 = vmatprep.subr.mxu0 0.0
        %1261 = vmatpush1.msra.mxu0 0.0
        %1262 = vmatprep.subr.mxu0 0.0
        %1263 = vmatpush1.msra.mxu0 0.0
        %1264 = vmatprep.subr.mxu0 0.0
        %1265 = vmatpush1.msra.mxu0 0.0
        %1266 = vmatprep.mubr.f32.mxu0 0.0
        %1267 = vmatmul.mubr.f32.gmra.mrb[0].mxu0 %v720
        %v1268 = vpop.f32.mrb[0].mxu0
        %v1269 = vadd.f32 %v629, %v1268
        %v1270 = vpop.f32.mrb[0].mxu0
        %v1271 = vadd.f32 %v630, %v1270
        %1272 = vdwg.mxu0
        %v1275 = vcombine.low %v1269, %v1271
        %s1277 = scalar_lea.vmem %s258, 16 [#allocation8]
        %1278 = vst [vmem:[%s1277] sm:$0xff] %v1275
        %s1279 = scalar_lea.vmem %s2, 64
        %v1280 = vld [vmem:[%s1279] sm:$0xff]
        %s1281 = scalar_lea.vmem %s2, 48
        %v1282 = vld [vmem:[%s1281] sm:$0xff]
        %v1284 = vsel %vm269, %v1282, 0
        %1286 = vmatprep.subr.mxu0 %v402
        %1287 = vmatpush1.msra.mxu0 %v401
        %1288 = vmatprep.subr.mxu0 0.0
        %1289 = vmatpush1.msra.mxu0 0.0
        %1290 = vmatprep.subr.mxu0 0.0
        %1291 = vmatpush1.msra.mxu0 0.0
        %1292 = vmatprep.subr.mxu0 0.0
        %1293 = vmatpush1.msra.mxu0 0.0
        %1294 = vmatprep.subr.mxu0 0.0
        %1295 = vmatpush1.msra.mxu0 0.0
        %1296 = vmatprep.subr.mxu0 0.0
        %1297 = vmatpush1.msra.mxu0 0.0
        %1298 = vmatprep.subr.mxu0 0.0
        %1299 = vmatpush1.msra.mxu0 0.0
        %1300 = vmatprep.subr.mxu0 0.0
        %1301 = vmatpush1.msra.mxu0 0.0
        %1302 = vmatprep.subr.mxu0 0.0
        %1303 = vmatpush1.msra.mxu0 0.0
        %1304 = vmatprep.subr.mxu0 0.0
        %1305 = vmatpush1.msra.mxu0 0.0
        %1306 = vmatprep.subr.mxu0 0.0
        %1307 = vmatpush1.msra.mxu0 0.0
        %1308 = vmatprep.subr.mxu0 0.0
        %1309 = vmatpush1.msra.mxu0 0.0
        %1310 = vmatprep.subr.mxu0 0.0
        %1311 = vmatpush1.msra.mxu0 0.0
        %1312 = vmatprep.subr.mxu0 0.0
        %1313 = vmatpush1.msra.mxu0 0.0
        %1314 = vmatprep.subr.mxu0 0.0
        %1315 = vmatpush1.msra.mxu0 0.0
        %1316 = vmatprep.subr.mxu0 0.0
        %1317 = vmatpush1.msra.mxu0 0.0
        %1318 = vmatprep.subr.mxu0 0.0
        %1319 = vmatpush1.msra.mxu0 0.0
        %1320 = vmatprep.subr.mxu0 0.0
        %1321 = vmatpush1.msra.mxu0 0.0
        %1322 = vmatprep.subr.mxu0 0.0
        %1323 = vmatpush1.msra.mxu0 0.0
        %1324 = vmatprep.subr.mxu0 0.0
        %1325 = vmatpush1.msra.mxu0 0.0
        %1326 = vmatprep.subr.mxu0 0.0
        %1327 = vmatpush1.msra.mxu0 0.0
        %1328 = vmatprep.subr.mxu0 0.0
        %1329 = vmatpush1.msra.mxu0 0.0
        %1330 = vmatprep.subr.mxu0 0.0
        %1331 = vmatpush1.msra.mxu0 0.0
        %1332 = vmatprep.subr.mxu0 0.0
        %1333 = vmatpush1.msra.mxu0 0.0
        %1334 = vmatprep.subr.mxu0 0.0
        %1335 = vmatpush1.msra.mxu0 0.0
        %1336 = vmatprep.subr.mxu0 0.0
        %1337 = vmatpush1.msra.mxu0 0.0
        %1338 = vmatprep.subr.mxu0 0.0
        %1339 = vmatpush1.msra.mxu0 0.0
        %1340 = vmatprep.subr.mxu0 0.0
        %1341 = vmatpush1.msra.mxu0 0.0
        %1342 = vmatprep.subr.mxu0 0.0
        %1343 = vmatpush1.msra.mxu0 0.0
        %1344 = vmatprep.subr.mxu0 0.0
        %1345 = vmatpush1.msra.mxu0 0.0
        %1346 = vmatprep.subr.mxu0 0.0
        %1347 = vmatpush1.msra.mxu0 0.0
        %1348 = vmatprep.subr.mxu0 0.0
        %1349 = vmatpush1.msra.mxu0 0.0
        %1350 = vmatprep.mubr.f32.mxu0 0.0
        %1351 = vmatmul.mubr.f32.gmra.mrb[0].mxu0 %v1284
        %v1352 = vpop.f32.mrb[0].mxu0
        %v1353 = vadd.f32 0.0, %v1352
        %v1354 = vpop.f32.mrb[0].mxu0
        %v1355 = vadd.f32 0.0, %v1354
        %1356 = vdwg.mxu0
        %v1358 = vsel %vm269, %v1280, 0
        %1360 = vmatprep.subr.mxu0 %v350
        %1361 = vmatpush1.msra.mxu0 %v349
        %1362 = vmatprep.subr.mxu0 0.0
        %1363 = vmatpush1.msra.mxu0 0.0
        %1364 = vmatprep.subr.mxu0 0.0
        %1365 = vmatpush1.msra.mxu0 0.0
        %1366 = vmatprep.subr.mxu0 0.0
        %1367 = vmatpush1.msra.mxu0 0.0
        %1368 = vmatprep.subr.mxu0 0.0
        %1369 = vmatpush1.msra.mxu0 0.0
        %1370 = vmatprep.subr.mxu0 0.0
        %1371 = vmatpush1.msra.mxu0 0.0
        %1372 = vmatprep.subr.mxu0 0.0
        %1373 = vmatpush1.msra.mxu0 0.0
        %1374 = vmatprep.subr.mxu0 0.0
        %1375 = vmatpush1.msra.mxu0 0.0
        %1376 = vmatprep.subr.mxu0 0.0
        %1377 = vmatpush1.msra.mxu0 0.0
        %1378 = vmatprep.subr.mxu0 0.0
        %1379 = vmatpush1.msra.mxu0 0.0
        %1380 = vmatprep.subr.mxu0 0.0
        %1381 = vmatpush1.msra.mxu0 0.0
        %1382 = vmatprep.subr.mxu0 0.0
        %1383 = vmatpush1.msra.mxu0 0.0
        %1384 = vmatprep.subr.mxu0 0.0
        %1385 = vmatpush1.msra.mxu0 0.0
        %1386 = vmatprep.subr.mxu0 0.0
        %1387 = vmatpush1.msra.mxu0 0.0
        %1388 = vmatprep.subr.mxu0 0.0
        %1389 = vmatpush1.msra.mxu0 0.0
        %1390 = vmatprep.subr.mxu0 0.0
        %1391 = vmatpush1.msra.mxu0 0.0
        %1392 = vmatprep.subr.mxu0 0.0
        %1393 = vmatpush1.msra.mxu0 0.0
        %1394 = vmatprep.subr.mxu0 0.0
        %1395 = vmatpush1.msra.mxu0 0.0
        %1396 = vmatprep.subr.mxu0 0.0
        %1397 = vmatpush1.msra.mxu0 0.0
        %1398 = vmatprep.subr.mxu0 0.0
        %1399 = vmatpush1.msra.mxu0 0.0
        %1400 = vmatprep.subr.mxu0 0.0
        %1401 = vmatpush1.msra.mxu0 0.0
        %1402 = vmatprep.subr.mxu0 0.0
        %1403 = vmatpush1.msra.mxu0 0.0
        %1404 = vmatprep.subr.mxu0 0.0
        %1405 = vmatpush1.msra.mxu0 0.0
        %1406 = vmatprep.subr.mxu0 0.0
        %1407 = vmatpush1.msra.mxu0 0.0
        %1408 = vmatprep.subr.mxu0 0.0
        %1409 = vmatpush1.msra.mxu0 0.0
        %1410 = vmatprep.subr.mxu0 0.0
        %1411 = vmatpush1.msra.mxu0 0.0
        %1412 = vmatprep.subr.mxu0 0.0
        %1413 = vmatpush1.msra.mxu0 0.0
        %1414 = vmatprep.subr.mxu0 0.0
        %1415 = vmatpush1.msra.mxu0 0.0
        %1416 = vmatprep.subr.mxu0 0.0
        %1417 = vmatpush1.msra.mxu0 0.0
        %1418 = vmatprep.subr.mxu0 0.0
        %1419 = vmatpush1.msra.mxu0 0.0
        %1420 = vmatprep.subr.mxu0 0.0
        %1421 = vmatpush1.msra.mxu0 0.0
        %1422 = vmatprep.subr.mxu0 0.0
        %1423 = vmatpush1.msra.mxu0 0.0
        %1424 = vmatprep.mubr.f32.mxu0 0.0
        %1425 = vmatmul.mubr.f32.gmra.mrb[0].mxu0 %v1358
        %v1426 = vpop.f32.mrb[0].mxu0
        %v1427 = vadd.f32 %v1353, %v1426
        %v1428 = vpop.f32.mrb[0].mxu0
        %v1429 = vadd.f32 %v1355, %v1428
        %1430 = vdwg.mxu0
        %s1431 = scalar_lea.vmem %s2, 16
        %v1432 = vld [vmem:[%s1431] sm:$0xff]
        %v1434 = vsel %vm269, %v1432, 0
        %1436 = vmatprep.subr.mxu0 %v1045
        %1437 = vmatpush1.msra.mxu0 %v1044
        %1438 = vmatprep.subr.mxu0 0.0
        %1439 = vmatpush1.msra.mxu0 0.0
        %1440 = vmatprep.subr.mxu0 0.0
        %1441 = vmatpush1.msra.mxu0 0.0
        %1442 = vmatprep.subr.mxu0 0.0
        %1443 = vmatpush1.msra.mxu0 0.0
        %1444 = vmatprep.subr.mxu0 0.0
        %1445 = vmatpush1.msra.mxu0 0.0
        %1446 = vmatprep.subr.mxu0 0.0
        %1447 = vmatpush1.msra.mxu0 0.0
        %1448 = vmatprep.subr.mxu0 0.0
        %1449 = vmatpush1.msra.mxu0 0.0
        %1450 = vmatprep.subr.mxu0 0.0
        %1451 = vmatpush1.msra.mxu0 0.0
        %1452 = vmatprep.subr.mxu0 0.0
        %1453 = vmatpush1.msra.mxu0 0.0
        %1454 = vmatprep.subr.mxu0 0.0
        %1455 = vmatpush1.msra.mxu0 0.0
        %1456 = vmatprep.subr.mxu0 0.0
        %1457 = vmatpush1.msra.mxu0 0.0
        %1458 = vmatprep.subr.mxu0 0.0
        %1459 = vmatpush1.msra.mxu0 0.0
        %1460 = vmatprep.subr.mxu0 0.0
        %1461 = vmatpush1.msra.mxu0 0.0
        %1462 = vmatprep.subr.mxu0 0.0
        %1463 = vmatpush1.msra.mxu0 0.0
        %1464 = vmatprep.subr.mxu0 0.0
        %1465 = vmatpush1.msra.mxu0 0.0
        %1466 = vmatprep.subr.mxu0 0.0
        %1467 = vmatpush1.msra.mxu0 0.0
        %1468 = vmatprep.subr.mxu0 0.0
        %1469 = vmatpush1.msra.mxu0 0.0
        %1470 = vmatprep.subr.mxu0 0.0
        %1471 = vmatpush1.msra.mxu0 0.0
        %1472 = vmatprep.subr.mxu0 0.0
        %1473 = vmatpush1.msra.mxu0 0.0
        %1474 = vmatprep.subr.mxu0 0.0
        %1475 = vmatpush1.msra.mxu0 0.0
        %1476 = vmatprep.subr.mxu0 0.0
        %1477 = vmatpush1.msra.mxu0 0.0
        %1478 = vmatprep.subr.mxu0 0.0
        %1479 = vmatpush1.msra.mxu0 0.0
        %1480 = vmatprep.subr.mxu0 0.0
        %1481 = vmatpush1.msra.mxu0 0.0
        %1482 = vmatprep.subr.mxu0 0.0
        %1483 = vmatpush1.msra.mxu0 0.0
        %1484 = vmatprep.subr.mxu0 0.0
        %1485 = vmatpush1.msra.mxu0 0.0
        %1486 = vmatprep.subr.mxu0 0.0
        %1487 = vmatpush1.msra.mxu0 0.0
        %1488 = vmatprep.subr.mxu0 0.0
        %1489 = vmatpush1.msra.mxu0 0.0
        %1490 = vmatprep.subr.mxu0 0.0
        %1491 = vmatpush1.msra.mxu0 0.0
        %1492 = vmatprep.subr.mxu0 0.0
        %1493 = vmatpush1.msra.mxu0 0.0
        %1494 = vmatprep.subr.mxu0 0.0
        %1495 = vmatpush1.msra.mxu0 0.0
        %1496 = vmatprep.subr.mxu0 0.0
        %1497 = vmatpush1.msra.mxu0 0.0
        %1498 = vmatprep.subr.mxu0 0.0
        %1499 = vmatpush1.msra.mxu0 0.0
        %1500 = vmatprep.mubr.f32.mxu0 0.0
        %1501 = vmatmul.mubr.f32.gmra.mrb[0].mxu0 %v1434
        %v1502 = vpop.f32.mrb[0].mxu0
        %v1503 = vadd.f32 0.0, %v1502
        %v1504 = vpop.f32.mrb[0].mxu0
        %v1505 = vadd.f32 0.0, %v1504
        %1506 = vdwg.mxu0
        %v1507 = vadd.f32 %v1427, %v1503
        %v1508 = vadd.f32 %v1429, %v1505
        %v1509 = vld [vmem:[%s2] sm:$0xff]
        %v1511 = vsel %vm269, %v1509, 0
        %1513 = vmatprep.subr.mxu0 %v415
        %1514 = vmatpush1.msra.mxu0 %v414
        %1515 = vmatprep.subr.mxu0 0.0
        %1516 = vmatpush1.msra.mxu0 0.0
        %1517 = vmatprep.subr.mxu0 0.0
        %1518 = vmatpush1.msra.mxu0 0.0
        %1519 = vmatprep.subr.mxu0 0.0
        %1520 = vmatpush1.msra.mxu0 0.0
        %1521 = vmatprep.subr.mxu0 0.0
        %1522 = vmatpush1.msra.mxu0 0.0
        %1523 = vmatprep.subr.mxu0 0.0
        %1524 = vmatpush1.msra.mxu0 0.0
        %1525 = vmatprep.subr.mxu0 0.0
        %1526 = vmatpush1.msra.mxu0 0.0
        %1527 = vmatprep.subr.mxu0 0.0
        %1528 = vmatpush1.msra.mxu0 0.0
        %1529 = vmatprep.subr.mxu0 0.0
        %1530 = vmatpush1.msra.mxu0 0.0
        %1531 = vmatprep.subr.mxu0 0.0
        %1532 = vmatpush1.msra.mxu0 0.0
        %1533 = vmatprep.subr.mxu0 0.0
        %1534 = vmatpush1.msra.mxu0 0.0
        %1535 = vmatprep.subr.mxu0 0.0
        %1536 = vmatpush1.msra.mxu0 0.0
        %1537 = vmatprep.subr.mxu0 0.0
        %1538 = vmatpush1.msra.mxu0 0.0
        %1539 = vmatprep.subr.mxu0 0.0
        %1540 = vmatpush1.msra.mxu0 0.0
        %1541 = vmatprep.subr.mxu0 0.0
        %1542 = vmatpush1.msra.mxu0 0.0
        %1543 = vmatprep.subr.mxu0 0.0
        %1544 = vmatpush1.msra.mxu0 0.0
        %1545 = vmatprep.subr.mxu0 0.0
        %1546 = vmatpush1.msra.mxu0 0.0
        %1547 = vmatprep.subr.mxu0 0.0
        %1548 = vmatpush1.msra.mxu0 0.0
        %1549 = vmatprep.subr.mxu0 0.0
        %1550 = vmatpush1.msra.mxu0 0.0
        %1551 = vmatprep.subr.mxu0 0.0
        %1552 = vmatpush1.msra.mxu0 0.0
        %1553 = vmatprep.subr.mxu0 0.0
        %1554 = vmatpush1.msra.mxu0 0.0
        %1555 = vmatprep.subr.mxu0 0.0
        %1556 = vmatpush1.msra.mxu0 0.0
        %1557 = vmatprep.subr.mxu0 0.0
        %1558 = vmatpush1.msra.mxu0 0.0
        %1559 = vmatprep.subr.mxu0 0.0
        %1560 = vmatpush1.msra.mxu0 0.0
        %1561 = vmatprep.subr.mxu0 0.0
        %1562 = vmatpush1.msra.mxu0 0.0
        %1563 = vmatprep.subr.mxu0 0.0
        %1564 = vmatpush1.msra.mxu0 0.0
        %1565 = vmatprep.subr.mxu0 0.0
        %1566 = vmatpush1.msra.mxu0 0.0
        %1567 = vmatprep.subr.mxu0 0.0
        %1568 = vmatpush1.msra.mxu0 0.0
        %1569 = vmatprep.subr.mxu0 0.0
        %1570 = vmatpush1.msra.mxu0 0.0
        %1571 = vmatprep.subr.mxu0 0.0
        %1572 = vmatpush1.msra.mxu0 0.0
        %1573 = vmatprep.subr.mxu0 0.0
        %1574 = vmatpush1.msra.mxu0 0.0
        %1575 = vmatprep.subr.mxu0 0.0
        %1576 = vmatpush1.msra.mxu0 0.0
        %1577 = vmatprep.mubr.f32.mxu0 0.0
        %1578 = vmatmul.mubr.f32.gmra.mrb[0].mxu0 %v1511
        %v1579 = vpop.f32.mrb[0].mxu0
        %v1580 = vadd.f32 0.0, %v1579
        %v1581 = vpop.f32.mrb[0].mxu0
        %v1582 = vadd.f32 0.0, %v1581
        %1583 = vdwg.mxu0
        %v1584 = vadd.f32 %v1507, %v1580
        %v1585 = vadd.f32 %v1508, %v1582
        %vm1586 = vcmp.ge.f32.partialorder %v1584, 0.0
        %vm1587 = vcmp.ge.f32.partialorder %v1585, 0.0
        %v1588 = vmul.f32 %v714, %v1584
        %v1589 = vmul.f32 %v714, %v1585
        %v1590 = vsel %vm1586, %v1584, %v1588
        %v1591 = vsel %vm1587, %v1585, %v1589
        %1592 = vmatprep.subr.mxu0 %v1591
        %1593 = vmatpush1.msra.mxu0 %v1590
        %1594 = vmatprep.subr.mxu0 0.0
        %1595 = vmatpush1.msra.mxu0 0.0
        %1596 = vmatprep.subr.mxu0 0.0
        %1597 = vmatpush1.msra.mxu0 0.0
        %1598 = vmatprep.subr.mxu0 0.0
        %1599 = vmatpush1.msra.mxu0 0.0
        %1600 = vmatprep.subr.mxu0 0.0
        %1601 = vmatpush1.msra.mxu0 0.0
        %1602 = vmatprep.subr.mxu0 0.0
        %1603 = vmatpush1.msra.mxu0 0.0
        %1604 = vmatprep.subr.mxu0 0.0
        %1605 = vmatpush1.msra.mxu0 0.0
        %1606 = vmatprep.subr.mxu0 0.0
        %1607 = vmatpush1.msra.mxu0 0.0
        %1608 = vmatprep.subr.mxu0 0.0
        %1609 = vmatpush1.msra.mxu0 0.0
        %1610 = vmatprep.subr.mxu0 0.0
        %1611 = vmatpush1.msra.mxu0 0.0
        %1612 = vmatprep.subr.mxu0 0.0
        %1613 = vmatpush1.msra.mxu0 0.0
        %1614 = vmatprep.subr.mxu0 0.0
        %1615 = vmatpush1.msra.mxu0 0.0
        %1616 = vmatprep.subr.mxu0 0.0
        %1617 = vmatpush1.msra.mxu0 0.0
        %1618 = vmatprep.subr.mxu0 0.0
        %1619 = vmatpush1.msra.mxu0 0.0
        %1620 = vmatprep.subr.mxu0 0.0
        %1621 = vmatpush1.msra.mxu0 0.0
        %1622 = vmatprep.subr.mxu0 0.0
        %1623 = vmatpush1.msra.mxu0 0.0
        %1624 = vmatprep.subr.mxu0 0.0
        %1625 = vmatpush1.msra.mxu0 0.0
        %1626 = vmatprep.subr.mxu0 0.0
        %1627 = vmatpush1.msra.mxu0 0.0
        %1628 = vmatprep.subr.mxu0 0.0
        %1629 = vmatpush1.msra.mxu0 0.0
        %1630 = vmatprep.subr.mxu0 0.0
        %1631 = vmatpush1.msra.mxu0 0.0
        %1632 = vmatprep.subr.mxu0 0.0
        %1633 = vmatpush1.msra.mxu0 0.0
        %1634 = vmatprep.subr.mxu0 0.0
        %1635 = vmatpush1.msra.mxu0 0.0
        %1636 = vmatprep.subr.mxu0 0.0
        %1637 = vmatpush1.msra.mxu0 0.0
        %1638 = vmatprep.subr.mxu0 0.0
        %1639 = vmatpush1.msra.mxu0 0.0
        %1640 = vmatprep.subr.mxu0 0.0
        %1641 = vmatpush1.msra.mxu0 0.0
        %1642 = vmatprep.subr.mxu0 0.0
        %1643 = vmatpush1.msra.mxu0 0.0
        %1644 = vmatprep.subr.mxu0 0.0
        %1645 = vmatpush1.msra.mxu0 0.0
        %1646 = vmatprep.subr.mxu0 0.0
        %1647 = vmatpush1.msra.mxu0 0.0
        %1648 = vmatprep.subr.mxu0 0.0
        %1649 = vmatpush1.msra.mxu0 0.0
        %1650 = vmatprep.subr.mxu0 0.0
        %1651 = vmatpush1.msra.mxu0 0.0
        %1652 = vmatprep.subr.mxu0 0.0
        %1653 = vmatpush1.msra.mxu0 0.0
        %1654 = vmatprep.subr.mxu0 0.0
        %1655 = vmatpush1.msra.mxu0 0.0
        %1656 = vmatprep.mubr.f32.mxu0 0.0
        %1657 = vmatmul.mubr.f32.gmra.mrb[0].mxu0 %v720
        %v1658 = vpop.f32.mrb[0].mxu0
        %v1659 = vadd.f32 %v633, %v1658
        %v1660 = vpop.f32.mrb[0].mxu0
        %v1661 = vadd.f32 %v634, %v1660
        %1662 = vdwg.mxu0
        %v1665 = vcombine.low %v1659, %v1661
        %s1667 = scalar_lea.vmem %s258, 24 [#allocation8]
        %1668 = vst [vmem:[%s1667] sm:$0xff] %v1665
        %s1669 = sand.u32 %s160, 1
        %s1670 = scalar_lea.sflag [#allocation6], %s1669
        %s1671 = sand.u32 %s160, 1
        %s1672 = smul.addr %s1671, 32
        %s1673 = scalar_lea.vmem [#allocation8], %s1672
        // Predicated region
        $region49: #{tpu_custom_call.1} parent=43 // pred_check
          %p1674 = pneg %p170
        $region50: #{tpu_custom_call.1} parent=43 // pred_check_branch
          %1676 = sbr.rel (%p1674) target = $region52
        $region51: #{tpu_custom_call.1} parent=43 // pred_region
          %s1678 = ssub.s32 512, 512
          %1679 = vsyncadd %s1670, %s1678
          %s1680 = smul.addr %s21, 8
          %s1681 = smul.addr %s1680, 64
          %s1682 = scalar_lea.hbm %s6, %s1681
          %s1683 = sshll.u32 %s1673, 4
          %s1684 = int_to_ptr.vmem [resolvable:$true] %s1683
          %1689 = dma.vmem_to_hbm [thread:$0]  %s1684, 512, %s1682, %s1670, 128, 128, 8
        $region52: #{tpu_custom_call.1} parent=43 // pred_fallthru
          _
      $region44: #{tpu_custom_call.1} parent=5 // pred_fallthru
        _
      %p1690 = scmp.le.s32.totalorder 2, %s16
      // Predicated region
      $region53: #{tpu_custom_call.1} parent=5 // pred_check
        %p1691 = pneg %p1690
      $region54: #{tpu_custom_call.1} parent=5 // pred_check_branch
        %1693 = sbr.rel (%p1691) target = $region56
      $region55: #{tpu_custom_call.1} parent=5 // pred_region
        %s1694 = ssub.s32 %s16, 2
        // Predicated region
        $region57: #{tpu_custom_call.1} parent=55 // pred_check
          %p1695 = pneg %p176
        $region58: #{tpu_custom_call.1} parent=55 // pred_check_branch
          %1697 = sbr.rel (%p1695) target = $region60
        $region59: #{tpu_custom_call.1} parent=55 // pred_region
          %s1698 = sand.u32 %s161, 1
          %s1699 = scalar_lea.sflag [#allocation6], %s1698
          %s1700 = sand.u32 %s161, 1
          %s1701 = smul.addr %s1700, 32
          %s1702 = scalar_lea.vmem [#allocation8], %s1701
          %1703 = dma.done %s1699, 512
        $region60: #{tpu_custom_call.1} parent=55 // pred_fallthru
          _
      $region56: #{tpu_custom_call.1} parent=5 // pred_fallthru
        _
    $region6: #{tpu_custom_call.1} parent=1 // loop_footer
      %s20 = sadd.s32 1, %s16
    $region7: #{tpu_custom_call.1} parent=1 // loop_footer_branch
      %15 = sbr.rel target = $region3
    $region8: #{tpu_custom_call.1} parent=1 // loop_exit
      _
    %1704 = vsyncpa [#allocation6], 1
    %s1705 = scalar_lea.sflag [#allocation6], 1
    %1706 = vsyncpa %s1705, 1
    %1707 = vsyncpa [#allocation7], 1
    %s1708 = scalar_lea.sflag [#allocation7], 1
    %1709 = vsyncpa %s1708, 1

</llo_original>
